<compile_context>
chip_gen: v6e
topology: v6e:2x2x1
jax: 0.10.0
libtpu: 0.0.40
codegen_flags: <defaults>
</compile_context>

<pallas_src>
import jax
import jax.numpy as jnp
from jax.experimental import pallas as pl
from jax.experimental.pallas import tpu as pltpu


# ----------------------------------------------------------------------------
# Fused kernel: LSTM (batch_first, single layer, unidirectional) + ReLU
#               + Flatten + Linear + ReLU + Dropout(eval: identity) + Linear
# ----------------------------------------------------------------------------
def _dqn_fused_kernel(x_ref, wih_ref, whh_ref, b_ref,
                      w1_ref, b1_ref, w2_ref, b2_ref, o_ref):
    # x_ref:   (Bp, T*F)    lane-packed batch-major input
    # wih_ref: (T*F, T*4H)  block-diagonal input weights, i/f/o cols pre-scaled by 0.5
    # whh_ref: (H, 4H)      hidden weights, i/f/o cols pre-scaled by 0.5
    # b_ref:   (1, T*4H)    (b_ih + b_hh) tiled per step, i/f/o cols pre-scaled by 0.5
    # w1_ref:  (T*H, L)     first Linear (acts on the flattened (B, T*H) LSTM output)
    # b1_ref:  (1, L)
    # w2_ref:  (L, O)       output Linear
    # b2_ref:  (1, O)
    # o_ref:   (Bp, O)      final Q-values
    H = whh_ref.shape[0]
    G = whh_ref.shape[1]          # 4H
    Bp = x_ref.shape[0]
    L = w1_ref.shape[1]
    T = w1_ref.shape[0] // H

    whh = whh_ref[...]

    # Hoisted input projection for ALL time steps at once (block-diagonal weight):
    # gates_in[:, t*4H:(t+1)*4H] = x_t @ wih_scaled + b_scaled   (whole-vreg slabs)
    gates_in = (
        jnp.dot(x_ref[...], wih_ref[...], preferred_element_type=jnp.float32)
        + b_ref[...]
    )  # (Bp, T*4H), PyTorch gate order [i, f, g, o] inside each step slab

    h = jnp.zeros((Bp, H), jnp.float32)
    c = jnp.zeros((Bp, H), jnp.float32)
    acc = jnp.zeros((Bp, L), jnp.float32)   # Linear1 folded into the recurrence

    # Fully unrolled recurrence (T static & small) -> static, vreg-aligned slices.
    for t in range(T):
        if t == 0:
            g = gates_in[:, 0:G]                              # h == 0 at t=0
        else:
            g = gates_in[:, t * G:(t + 1) * G] + jnp.dot(
                h, whh, preferred_element_type=jnp.float32)    # (Bp, 4H)
        # Single EUP pass: i/f/o pre-activations were halved, so tanh(g) holds
        # tanh(x/2) on those lanes and sigmoid(x) = 0.5*tanh(x/2) + 0.5.
        th = jnp.tanh(g)
        sg = 0.5 * th + 0.5          # valid on i/f/o lanes; g-lane slice unused
        i_g = sg[:, 0:H]
        f_g = sg[:, H:2 * H]
        g_g = th[:, 2 * H:3 * H]
        o_g = sg[:, 3 * H:4 * H]
        if t == 0:
            c = i_g * g_g                                      # c == 0 at t=0
        else:
            c = f_g * c + i_g * g_g
        h = o_g * jnp.tanh(c)
        # Flatten + Linear1 folded in: acc += relu(h_t) @ w1[t*H:(t+1)*H, :]
        # (w1 slab is a sublane-aligned static ref slice).
        acc = acc + jnp.dot(jnp.maximum(h, 0.0),
                            w1_ref[t * H:(t + 1) * H, :],
                            preferred_element_type=jnp.float32)

    # MLP head epilogue: bias + ReLU -> Dropout(eval) -> output Linear.
    hid = jnp.maximum(acc + b1_ref[...], 0.0)
    # TODO(synk): training-mode dropout (PRNG mask + 1/(1-p) scaling) not implemented;
    #             eval-mode nn.Dropout is the identity, which is what we compute here.
    o_ref[...] = (
        jnp.dot(hid, w2_ref[...], preferred_element_type=jnp.float32) + b2_ref[...]
    )


# ----------------------------------------------------------------------------
# Parameter preparation (done once): gate pre-scaling + block-diagonal wih.
# ----------------------------------------------------------------------------
def prepare_params(raw_params):
    wih_t, whh_t, b_lstm, w1, b1, w2, b2 = raw_params
    H = whh_t.shape[0]
    T = w1.shape[0] // H
    # PyTorch gate order [i, f, g, o]: scale i/f/o columns by 0.5 (exact in fp),
    # so one tanh recovers both tanh(g) and sigmoid(i/f/o) via 0.5*t + 0.5.
    scale = jnp.concatenate([
        jnp.full((2 * H,), 0.5, jnp.float32),   # i, f
        jnp.ones((H,), jnp.float32),            # g
        jnp.full((H,), 0.5, jnp.float32),       # o
    ])
    wih_s = wih_t * scale[None, :]
    whh_s = whh_t * scale[None, :]
    b_s = b_lstm * scale[None, :]
    # Block-diagonal input weight: (T*F, T*4H); x stays lane-packed (Bp, T*F).
    wih_bd = jnp.kron(jnp.eye(T, dtype=jnp.float32), wih_s)
    b_tiled = jnp.tile(b_s, (1, T))             # (1, T*4H)
    return (wih_bd, whh_s, b_tiled, w1, b1, w2, b2)


# ----------------------------------------------------------------------------
# Wrapper / glue
# ----------------------------------------------------------------------------
@jax.jit
def dqn_forward(x_btf, kparams):
    """x_btf: (B, T, n_features), batch-first like the PyTorch module (eval mode)."""
    wih_bd, whh_s, b_tiled, w1, b1, w2, b2 = kparams
    B, T, F = x_btf.shape
    O = w2.shape[1]

    # Lane-packed input: (B, T*F), pad batch to a multiple of 8 (f32 sublanes).
    Bp = ((B + 7) // 8) * 8
    x_flat = x_btf.reshape(B, T * F)
    if Bp != B:
        x_flat = jnp.pad(x_flat, ((0, Bp - B), (0, 0)))

    vmem = pl.BlockSpec(memory_space=pltpu.MemorySpace.VMEM)
    out = pl.pallas_call(
        _dqn_fused_kernel,
        out_shape=jax.ShapeDtypeStruct((Bp, O), jnp.float32),
        in_specs=[vmem] * 8,
        out_specs=vmem,
        # NOTE: at B=2 do NOT add a grid / megacore sharding — pure overhead.
        #       For learner-sized batches (>=128), add a leading batch grid axis
        #       with dimension_semantics=("parallel",).
    )(x_flat, wih_bd, whh_s, b_tiled, w1, b1, w2, b2)
    return out[:B]


def dqn_forward_reference(x_btf, raw_params):
    """Pure-JAX reference (mirrors the PyTorch forward in eval mode)."""
    wih_t, whh_t, b_lstm, w1, b1, w2, b2 = raw_params
    B, T, F = x_btf.shape
    H = whh_t.shape[0]
    h = jnp.zeros((B, H), jnp.float32)
    c = jnp.zeros((B, H), jnp.float32)
    hs = []
    for t in range(T):
        gates = x_btf[:, t, :] @ wih_t + h @ whh_t + b_lstm
        i = jax.nn.sigmoid(gates[:, 0:H])
        f = jax.nn.sigmoid(gates[:, H:2 * H])
        g = jnp.tanh(gates[:, 2 * H:3 * H])
        o = jax.nn.sigmoid(gates[:, 3 * H:4 * H])
        c = f * c + i * g
        h = o * jnp.tanh(c)
        hs.append(h)
    out = jnp.stack(hs, axis=1)                      # (B, T, H)
    out = jnp.maximum(out, 0.0)
    flat = out.reshape(B, T * H)
    hid = jnp.maximum(flat @ w1 + b1, 0.0)
    return hid @ w2 + b2


def init_params(key, n_features, hidden_lstm_dim, linear_dim, output_dim, seq_len):
    """Deterministic init mimicking PyTorch default U(-1/sqrt(fan), 1/sqrt(fan))."""
    H, F, L, O, T = hidden_lstm_dim, n_features, linear_dim, output_dim, seq_len
    ks = jax.random.split(key, 8)

    k_lstm = 1.0 / jnp.sqrt(H)
    wih_t = jax.random.uniform(ks[0], (F, 4 * H), jnp.float32, -k_lstm, k_lstm)
    whh_t = jax.random.uniform(ks[1], (H, 4 * H), jnp.float32, -k_lstm, k_lstm)
    b_ih = jax.random.uniform(ks[2], (1, 4 * H), jnp.float32, -k_lstm, k_lstm)
    b_hh = jax.random.uniform(ks[3], (1, 4 * H), jnp.float32, -k_lstm, k_lstm)
    b_lstm = b_ih + b_hh

    din = T * H
    k1 = 1.0 / jnp.sqrt(din)
    w1 = jax.random.uniform(ks[4], (din, L), jnp.float32, -k1, k1)
    b1 = jax.random.uniform(ks[5], (1, L), jnp.float32, -k1, k1)

    k2 = 1.0 / jnp.sqrt(L)
    w2 = jax.random.uniform(ks[6], (L, O), jnp.float32, -k2, k2)
    b2 = jax.random.uniform(ks[7], (1, O), jnp.float32, -k2, k2)

    return (wih_t, whh_t, b_lstm, w1, b1, w2, b2)


if __name__ == "__main__":
    # Small shapes consistent with the module's forward:
    B, T = 2, 8
    n_features = 4
    hidden_lstm_dim = 32
    linear_dim = 32
    output_dim = 4

    key = jax.random.PRNGKey(0)
    k_x, k_p = jax.random.split(key)
    x = jax.random.normal(k_x, (B, T, n_features), jnp.float32)  # batch-first, like nn.LSTM(batch_first=True)
    raw_params = init_params(k_p, n_features, hidden_lstm_dim, linear_dim, output_dim, T)
    kparams = prepare_params(raw_params)

    out = dqn_forward(x, kparams)
    out = jax.block_until_ready(out)

    ref = dqn_forward_reference(x, raw_params)
    assert out.shape == (B, output_dim), out.shape
    assert jnp.allclose(out, ref, atol=1e-4, rtol=1e-4), (out, ref)

    print("KERNEL_OK")
</pallas_src>

<mosaic_0001>
module attributes {stable_mosaic.version = 11 : i64} {
  func.func @_dqn_fused_kernel(%arg0: memref<8x32xf32, #tpu.memory_space<vmem>>, %arg1: memref<32x1024xf32, #tpu.memory_space<vmem>>, %arg2: memref<32x128xf32, #tpu.memory_space<vmem>>, %arg3: memref<1x1024xf32, #tpu.memory_space<vmem>>, %arg4: memref<256x32xf32, #tpu.memory_space<vmem>>, %arg5: memref<1x32xf32, #tpu.memory_space<vmem>>, %arg6: memref<32x4xf32, #tpu.memory_space<vmem>>, %arg7: memref<1x4xf32, #tpu.memory_space<vmem>>, %arg8: memref<8x4xf32, #tpu.memory_space<vmem>>) attributes {dimension_semantics = [], scalar_prefetch = 0 : i64, scratch_operands = 0 : i64, tpu.core_type = #tpu.core_type<tc>} {
    %c0 = arith.constant 0 : index
    %c0_0 = arith.constant 0 : index
    %0 = vector.load %arg2[%c0, %c0_0] : memref<32x128xf32, #tpu.memory_space<vmem>>, vector<32x128xf32>
    %c0_1 = arith.constant 0 : index
    %c0_2 = arith.constant 0 : index
    %1 = vector.load %arg0[%c0_1, %c0_2] : memref<8x32xf32, #tpu.memory_space<vmem>>, vector<8x32xf32>
    %c0_3 = arith.constant 0 : index
    %c0_4 = arith.constant 0 : index
    %2 = vector.load %arg1[%c0_3, %c0_4] : memref<32x1024xf32, #tpu.memory_space<vmem>>, vector<32x1024xf32>
    %cst = arith.constant dense<0.000000e+00> : vector<8x1024xf32>
    %3 = tpu.matmul %1, %2, %cst {dimension_numbers = #tpu.dot_dimension_numbers<[1], [0], [0], [1], [0, 0, 1, 1], [], []>} : vector<8x32xf32>, vector<32x1024xf32>, vector<8x1024xf32> -> vector<8x1024xf32>
    %c0_5 = arith.constant 0 : index
    %c0_6 = arith.constant 0 : index
    %4 = vector.load %arg3[%c0_5, %c0_6] : memref<1x1024xf32, #tpu.memory_space<vmem>>, vector<1x1024xf32>
    %5 = vector.broadcast %4 : vector<1x1024xf32> to vector<8x1024xf32>
    %6 = arith.addf %3, %5 : vector<8x1024xf32>
    %cst_7 = arith.constant 0.000000e+00 : f32
    %7 = vector.broadcast %cst_7 : f32 to vector<8x32xf32>
    %8 = vector.extract_strided_slice %6 {offsets = [0, 0], sizes = [8, 128], strides = [1, 1]} : vector<8x1024xf32> to vector<8x128xf32>
    %9 = math.tanh %8 : vector<8x128xf32>
    %cst_8 = arith.constant 5.000000e-01 : f32
    %10 = vector.broadcast %cst_8 : f32 to vector<8x128xf32>
    %11 = arith.mulf %10, %9 : vector<8x128xf32>
    %cst_9 = arith.constant 5.000000e-01 : f32
    %12 = vector.broadcast %cst_9 : f32 to vector<8x128xf32>
    %13 = arith.addf %11, %12 : vector<8x128xf32>
    %14 = vector.extract_strided_slice %13 {offsets = [0, 0], sizes = [8, 32], strides = [1, 1]} : vector<8x128xf32> to vector<8x32xf32>
    %15 = vector.extract_strided_slice %9 {offsets = [0, 64], sizes = [8, 32], strides = [1, 1]} : vector<8x128xf32> to vector<8x32xf32>
    %16 = vector.extract_strided_slice %13 {offsets = [0, 96], sizes = [8, 32], strides = [1, 1]} : vector<8x128xf32> to vector<8x32xf32>
    %17 = arith.mulf %14, %15 : vector<8x32xf32>
    %18 = math.tanh %17 : vector<8x32xf32>
    %19 = arith.mulf %16, %18 : vector<8x32xf32>
    %cst_10 = arith.constant 0.000000e+00 : f32
    %20 = vector.broadcast %cst_10 : f32 to vector<8x32xf32>
    %21 = arith.maximumf %19, %20 : vector<8x32xf32>
    %c0_11 = arith.constant 0 : index
    %c0_12 = arith.constant 0 : index
    %22 = vector.load %arg4[%c0_11, %c0_12] : memref<256x32xf32, #tpu.memory_space<vmem>>, vector<32x32xf32>
    %cst_13 = arith.constant dense<0.000000e+00> : vector<8x32xf32>
    %23 = tpu.matmul %21, %22, %cst_13 {dimension_numbers = #tpu.dot_dimension_numbers<[1], [0], [0], [1], [0, 0, 1, 1], [], []>} : vector<8x32xf32>, vector<32x32xf32>, vector<8x32xf32> -> vector<8x32xf32>
    %24 = arith.addf %7, %23 : vector<8x32xf32>
    %25 = vector.extract_strided_slice %6 {offsets = [0, 128], sizes = [8, 128], strides = [1, 1]} : vector<8x1024xf32> to vector<8x128xf32>
    %cst_14 = arith.constant dense<0.000000e+00> : vector<8x128xf32>
    %26 = tpu.matmul %19, %0, %cst_14 {dimension_numbers = #tpu.dot_dimension_numbers<[1], [0], [0], [1], [0, 0, 1, 1], [], []>} : vector<8x32xf32>, vector<32x128xf32>, vector<8x128xf32> -> vector<8x128xf32>
    %27 = arith.addf %25, %26 : vector<8x128xf32>
    %28 = math.tanh %27 : vector<8x128xf32>
    %cst_15 = arith.constant 5.000000e-01 : f32
    %29 = vector.broadcast %cst_15 : f32 to vector<8x128xf32>
    %30 = arith.mulf %29, %28 : vector<8x128xf32>
    %cst_16 = arith.constant 5.000000e-01 : f32
    %31 = vector.broadcast %cst_16 : f32 to vector<8x128xf32>
    %32 = arith.addf %30, %31 : vector<8x128xf32>
    %33 = vector.extract_strided_slice %32 {offsets = [0, 0], sizes = [8, 32], strides = [1, 1]} : vector<8x128xf32> to vector<8x32xf32>
    %34 = vector.extract_strided_slice %32 {offsets = [0, 32], sizes = [8, 32], strides = [1, 1]} : vector<8x128xf32> to vector<8x32xf32>
    %35 = vector.extract_strided_slice %28 {offsets = [0, 64], sizes = [8, 32], strides = [1, 1]} : vector<8x128xf32> to vector<8x32xf32>
    %36 = vector.extract_strided_slice %32 {offsets = [0, 96], sizes = [8, 32], strides = [1, 1]} : vector<8x128xf32> to vector<8x32xf32>
    %37 = arith.mulf %34, %17 : vector<8x32xf32>
    %38 = arith.mulf %33, %35 : vector<8x32xf32>
    %39 = arith.addf %37, %38 : vector<8x32xf32>
    %40 = math.tanh %39 : vector<8x32xf32>
    %41 = arith.mulf %36, %40 : vector<8x32xf32>
    %cst_17 = arith.constant 0.000000e+00 : f32
    %42 = vector.broadcast %cst_17 : f32 to vector<8x32xf32>
    %43 = arith.maximumf %41, %42 : vector<8x32xf32>
    %c32 = arith.constant 32 : index
    %c0_18 = arith.constant 0 : index
    %44 = vector.load %arg4[%c32, %c0_18] : memref<256x32xf32, #tpu.memory_space<vmem>>, vector<32x32xf32>
    %cst_19 = arith.constant dense<0.000000e+00> : vector<8x32xf32>
    %45 = tpu.matmul %43, %44, %cst_19 {dimension_numbers = #tpu.dot_dimension_numbers<[1], [0], [0], [1], [0, 0, 1, 1], [], []>} : vector<8x32xf32>, vector<32x32xf32>, vector<8x32xf32> -> vector<8x32xf32>
    %46 = arith.addf %24, %45 : vector<8x32xf32>
    %47 = vector.extract_strided_slice %6 {offsets = [0, 256], sizes = [8, 128], strides = [1, 1]} : vector<8x1024xf32> to vector<8x128xf32>
    %cst_20 = arith.constant dense<0.000000e+00> : vector<8x128xf32>
    %48 = tpu.matmul %41, %0, %cst_20 {dimension_numbers = #tpu.dot_dimension_numbers<[1], [0], [0], [1], [0, 0, 1, 1], [], []>} : vector<8x32xf32>, vector<32x128xf32>, vector<8x128xf32> -> vector<8x128xf32>
    %49 = arith.addf %47, %48 : vector<8x128xf32>
    %50 = math.tanh %49 : vector<8x128xf32>
    %cst_21 = arith.constant 5.000000e-01 : f32
    %51 = vector.broadcast %cst_21 : f32 to vector<8x128xf32>
    %52 = arith.mulf %51, %50 : vector<8x128xf32>
    %cst_22 = arith.constant 5.000000e-01 : f32
    %53 = vector.broadcast %cst_22 : f32 to vector<8x128xf32>
    %54 = arith.addf %52, %53 : vector<8x128xf32>
    %55 = vector.extract_strided_slice %54 {offsets = [0, 0], sizes = [8, 32], strides = [1, 1]} : vector<8x128xf32> to vector<8x32xf32>
    %56 = vector.extract_strided_slice %54 {offsets = [0, 32], sizes = [8, 32], strides = [1, 1]} : vector<8x128xf32> to vector<8x32xf32>
    %57 = vector.extract_strided_slice %50 {offsets = [0, 64], sizes = [8, 32], strides = [1, 1]} : vector<8x128xf32> to vector<8x32xf32>
    %58 = vector.extract_strided_slice %54 {offsets = [0, 96], sizes = [8, 32], strides = [1, 1]} : vector<8x128xf32> to vector<8x32xf32>
    %59 = arith.mulf %56, %39 : vector<8x32xf32>
    %60 = arith.mulf %55, %57 : vector<8x32xf32>
    %61 = arith.addf %59, %60 : vector<8x32xf32>
    %62 = math.tanh %61 : vector<8x32xf32>
    %63 = arith.mulf %58, %62 : vector<8x32xf32>
    %cst_23 = arith.constant 0.000000e+00 : f32
    %64 = vector.broadcast %cst_23 : f32 to vector<8x32xf32>
    %65 = arith.maximumf %63, %64 : vector<8x32xf32>
    %c64 = arith.constant 64 : index
    %c0_24 = arith.constant 0 : index
    %66 = vector.load %arg4[%c64, %c0_24] : memref<256x32xf32, #tpu.memory_space<vmem>>, vector<32x32xf32>
    %cst_25 = arith.constant dense<0.000000e+00> : vector<8x32xf32>
    %67 = tpu.matmul %65, %66, %cst_25 {dimension_numbers = #tpu.dot_dimension_numbers<[1], [0], [0], [1], [0, 0, 1, 1], [], []>} : vector<8x32xf32>, vector<32x32xf32>, vector<8x32xf32> -> vector<8x32xf32>
    %68 = arith.addf %46, %67 : vector<8x32xf32>
    %69 = vector.extract_strided_slice %6 {offsets = [0, 384], sizes = [8, 128], strides = [1, 1]} : vector<8x1024xf32> to vector<8x128xf32>
    %cst_26 = arith.constant dense<0.000000e+00> : vector<8x128xf32>
    %70 = tpu.matmul %63, %0, %cst_26 {dimension_numbers = #tpu.dot_dimension_numbers<[1], [0], [0], [1], [0, 0, 1, 1], [], []>} : vector<8x32xf32>, vector<32x128xf32>, vector<8x128xf32> -> vector<8x128xf32>
    %71 = arith.addf %69, %70 : vector<8x128xf32>
    %72 = math.tanh %71 : vector<8x128xf32>
    %cst_27 = arith.constant 5.000000e-01 : f32
    %73 = vector.broadcast %cst_27 : f32 to vector<8x128xf32>
    %74 = arith.mulf %73, %72 : vector<8x128xf32>
    %cst_28 = arith.constant 5.000000e-01 : f32
    %75 = vector.broadcast %cst_28 : f32 to vector<8x128xf32>
    %76 = arith.addf %74, %75 : vector<8x128xf32>
    %77 = vector.extract_strided_slice %76 {offsets = [0, 0], sizes = [8, 32], strides = [1, 1]} : vector<8x128xf32> to vector<8x32xf32>
    %78 = vector.extract_strided_slice %76 {offsets = [0, 32], sizes = [8, 32], strides = [1, 1]} : vector<8x128xf32> to vector<8x32xf32>
    %79 = vector.extract_strided_slice %72 {offsets = [0, 64], sizes = [8, 32], strides = [1, 1]} : vector<8x128xf32> to vector<8x32xf32>
    %80 = vector.extract_strided_slice %76 {offsets = [0, 96], sizes = [8, 32], strides = [1, 1]} : vector<8x128xf32> to vector<8x32xf32>
    %81 = arith.mulf %78, %61 : vector<8x32xf32>
    %82 = arith.mulf %77, %79 : vector<8x32xf32>
    %83 = arith.addf %81, %82 : vector<8x32xf32>
    %84 = math.tanh %83 : vector<8x32xf32>
    %85 = arith.mulf %80, %84 : vector<8x32xf32>
    %cst_29 = arith.constant 0.000000e+00 : f32
    %86 = vector.broadcast %cst_29 : f32 to vector<8x32xf32>
    %87 = arith.maximumf %85, %86 : vector<8x32xf32>
    %c96 = arith.constant 96 : index
    %c0_30 = arith.constant 0 : index
    %88 = vector.load %arg4[%c96, %c0_30] : memref<256x32xf32, #tpu.memory_space<vmem>>, vector<32x32xf32>
    %cst_31 = arith.constant dense<0.000000e+00> : vector<8x32xf32>
    %89 = tpu.matmul %87, %88, %cst_31 {dimension_numbers = #tpu.dot_dimension_numbers<[1], [0], [0], [1], [0, 0, 1, 1], [], []>} : vector<8x32xf32>, vector<32x32xf32>, vector<8x32xf32> -> vector<8x32xf32>
    %90 = arith.addf %68, %89 : vector<8x32xf32>
    %91 = vector.extract_strided_slice %6 {offsets = [0, 512], sizes = [8, 128], strides = [1, 1]} : vector<8x1024xf32> to vector<8x128xf32>
    %cst_32 = arith.constant dense<0.000000e+00> : vector<8x128xf32>
    %92 = tpu.matmul %85, %0, %cst_32 {dimension_numbers = #tpu.dot_dimension_numbers<[1], [0], [0], [1], [0, 0, 1, 1], [], []>} : vector<8x32xf32>, vector<32x128xf32>, vector<8x128xf32> -> vector<8x128xf32>
    %93 = arith.addf %91, %92 : vector<8x128xf32>
    %94 = math.tanh %93 : vector<8x128xf32>
    %cst_33 = arith.constant 5.000000e-01 : f32
    %95 = vector.broadcast %cst_33 : f32 to vector<8x128xf32>
    %96 = arith.mulf %95, %94 : vector<8x128xf32>
    %cst_34 = arith.constant 5.000000e-01 : f32
    %97 = vector.broadcast %cst_34 : f32 to vector<8x128xf32>
    %98 = arith.addf %96, %97 : vector<8x128xf32>
    %99 = vector.extract_strided_slice %98 {offsets = [0, 0], sizes = [8, 32], strides = [1, 1]} : vector<8x128xf32> to vector<8x32xf32>
    %100 = vector.extract_strided_slice %98 {offsets = [0, 32], sizes = [8, 32], strides = [1, 1]} : vector<8x128xf32> to vector<8x32xf32>
    %101 = vector.extract_strided_slice %94 {offsets = [0, 64], sizes = [8, 32], strides = [1, 1]} : vector<8x128xf32> to vector<8x32xf32>
    %102 = vector.extract_strided_slice %98 {offsets = [0, 96], sizes = [8, 32], strides = [1, 1]} : vector<8x128xf32> to vector<8x32xf32>
    %103 = arith.mulf %100, %83 : vector<8x32xf32>
    %104 = arith.mulf %99, %101 : vector<8x32xf32>
    %105 = arith.addf %103, %104 : vector<8x32xf32>
    %106 = math.tanh %105 : vector<8x32xf32>
    %107 = arith.mulf %102, %106 : vector<8x32xf32>
    %cst_35 = arith.constant 0.000000e+00 : f32
    %108 = vector.broadcast %cst_35 : f32 to vector<8x32xf32>
    %109 = arith.maximumf %107, %108 : vector<8x32xf32>
    %c128 = arith.constant 128 : index
    %c0_36 = arith.constant 0 : index
    %110 = vector.load %arg4[%c128, %c0_36] : memref<256x32xf32, #tpu.memory_space<vmem>>, vector<32x32xf32>
    %cst_37 = arith.constant dense<0.000000e+00> : vector<8x32xf32>
    %111 = tpu.matmul %109, %110, %cst_37 {dimension_numbers = #tpu.dot_dimension_numbers<[1], [0], [0], [1], [0, 0, 1, 1], [], []>} : vector<8x32xf32>, vector<32x32xf32>, vector<8x32xf32> -> vector<8x32xf32>
    %112 = arith.addf %90, %111 : vector<8x32xf32>
    %113 = vector.extract_strided_slice %6 {offsets = [0, 640], sizes = [8, 128], strides = [1, 1]} : vector<8x1024xf32> to vector<8x128xf32>
    %cst_38 = arith.constant dense<0.000000e+00> : vector<8x128xf32>
    %114 = tpu.matmul %107, %0, %cst_38 {dimension_numbers = #tpu.dot_dimension_numbers<[1], [0], [0], [1], [0, 0, 1, 1], [], []>} : vector<8x32xf32>, vector<32x128xf32>, vector<8x128xf32> -> vector<8x128xf32>
    %115 = arith.addf %113, %114 : vector<8x128xf32>
    %116 = math.tanh %115 : vector<8x128xf32>
    %cst_39 = arith.constant 5.000000e-01 : f32
    %117 = vector.broadcast %cst_39 : f32 to vector<8x128xf32>
    %118 = arith.mulf %117, %116 : vector<8x128xf32>
    %cst_40 = arith.constant 5.000000e-01 : f32
    %119 = vector.broadcast %cst_40 : f32 to vector<8x128xf32>
    %120 = arith.addf %118, %119 : vector<8x128xf32>
    %121 = vector.extract_strided_slice %120 {offsets = [0, 0], sizes = [8, 32], strides = [1, 1]} : vector<8x128xf32> to vector<8x32xf32>
    %122 = vector.extract_strided_slice %120 {offsets = [0, 32], sizes = [8, 32], strides = [1, 1]} : vector<8x128xf32> to vector<8x32xf32>
    %123 = vector.extract_strided_slice %116 {offsets = [0, 64], sizes = [8, 32], strides = [1, 1]} : vector<8x128xf32> to vector<8x32xf32>
    %124 = vector.extract_strided_slice %120 {offsets = [0, 96], sizes = [8, 32], strides = [1, 1]} : vector<8x128xf32> to vector<8x32xf32>
    %125 = arith.mulf %122, %105 : vector<8x32xf32>
    %126 = arith.mulf %121, %123 : vector<8x32xf32>
    %127 = arith.addf %125, %126 : vector<8x32xf32>
    %128 = math.tanh %127 : vector<8x32xf32>
    %129 = arith.mulf %124, %128 : vector<8x32xf32>
    %cst_41 = arith.constant 0.000000e+00 : f32
    %130 = vector.broadcast %cst_41 : f32 to vector<8x32xf32>
    %131 = arith.maximumf %129, %130 : vector<8x32xf32>
    %c160 = arith.constant 160 : index
    %c0_42 = arith.constant 0 : index
    %132 = vector.load %arg4[%c160, %c0_42] : memref<256x32xf32, #tpu.memory_space<vmem>>, vector<32x32xf32>
    %cst_43 = arith.constant dense<0.000000e+00> : vector<8x32xf32>
    %133 = tpu.matmul %131, %132, %cst_43 {dimension_numbers = #tpu.dot_dimension_numbers<[1], [0], [0], [1], [0, 0, 1, 1], [], []>} : vector<8x32xf32>, vector<32x32xf32>, vector<8x32xf32> -> vector<8x32xf32>
    %134 = arith.addf %112, %133 : vector<8x32xf32>
    %135 = vector.extract_strided_slice %6 {offsets = [0, 768], sizes = [8, 128], strides = [1, 1]} : vector<8x1024xf32> to vector<8x128xf32>
    %cst_44 = arith.constant dense<0.000000e+00> : vector<8x128xf32>
    %136 = tpu.matmul %129, %0, %cst_44 {dimension_numbers = #tpu.dot_dimension_numbers<[1], [0], [0], [1], [0, 0, 1, 1], [], []>} : vector<8x32xf32>, vector<32x128xf32>, vector<8x128xf32> -> vector<8x128xf32>
    %137 = arith.addf %135, %136 : vector<8x128xf32>
    %138 = math.tanh %137 : vector<8x128xf32>
    %cst_45 = arith.constant 5.000000e-01 : f32
    %139 = vector.broadcast %cst_45 : f32 to vector<8x128xf32>
    %140 = arith.mulf %139, %138 : vector<8x128xf32>
    %cst_46 = arith.constant 5.000000e-01 : f32
    %141 = vector.broadcast %cst_46 : f32 to vector<8x128xf32>
    %142 = arith.addf %140, %141 : vector<8x128xf32>
    %143 = vector.extract_strided_slice %142 {offsets = [0, 0], sizes = [8, 32], strides = [1, 1]} : vector<8x128xf32> to vector<8x32xf32>
    %144 = vector.extract_strided_slice %142 {offsets = [0, 32], sizes = [8, 32], strides = [1, 1]} : vector<8x128xf32> to vector<8x32xf32>
    %145 = vector.extract_strided_slice %138 {offsets = [0, 64], sizes = [8, 32], strides = [1, 1]} : vector<8x128xf32> to vector<8x32xf32>
    %146 = vector.extract_strided_slice %142 {offsets = [0, 96], sizes = [8, 32], strides = [1, 1]} : vector<8x128xf32> to vector<8x32xf32>
    %147 = arith.mulf %144, %127 : vector<8x32xf32>
    %148 = arith.mulf %143, %145 : vector<8x32xf32>
    %149 = arith.addf %147, %148 : vector<8x32xf32>
    %150 = math.tanh %149 : vector<8x32xf32>
    %151 = arith.mulf %146, %150 : vector<8x32xf32>
    %cst_47 = arith.constant 0.000000e+00 : f32
    %152 = vector.broadcast %cst_47 : f32 to vector<8x32xf32>
    %153 = arith.maximumf %151, %152 : vector<8x32xf32>
    %c192 = arith.constant 192 : index
    %c0_48 = arith.constant 0 : index
    %154 = vector.load %arg4[%c192, %c0_48] : memref<256x32xf32, #tpu.memory_space<vmem>>, vector<32x32xf32>
    %cst_49 = arith.constant dense<0.000000e+00> : vector<8x32xf32>
    %155 = tpu.matmul %153, %154, %cst_49 {dimension_numbers = #tpu.dot_dimension_numbers<[1], [0], [0], [1], [0, 0, 1, 1], [], []>} : vector<8x32xf32>, vector<32x32xf32>, vector<8x32xf32> -> vector<8x32xf32>
    %156 = arith.addf %134, %155 : vector<8x32xf32>
    %157 = vector.extract_strided_slice %6 {offsets = [0, 896], sizes = [8, 128], strides = [1, 1]} : vector<8x1024xf32> to vector<8x128xf32>
    %cst_50 = arith.constant dense<0.000000e+00> : vector<8x128xf32>
    %158 = tpu.matmul %151, %0, %cst_50 {dimension_numbers = #tpu.dot_dimension_numbers<[1], [0], [0], [1], [0, 0, 1, 1], [], []>} : vector<8x32xf32>, vector<32x128xf32>, vector<8x128xf32> -> vector<8x128xf32>
    %159 = arith.addf %157, %158 : vector<8x128xf32>
    %160 = math.tanh %159 : vector<8x128xf32>
    %cst_51 = arith.constant 5.000000e-01 : f32
    %161 = vector.broadcast %cst_51 : f32 to vector<8x128xf32>
    %162 = arith.mulf %161, %160 : vector<8x128xf32>
    %cst_52 = arith.constant 5.000000e-01 : f32
    %163 = vector.broadcast %cst_52 : f32 to vector<8x128xf32>
    %164 = arith.addf %162, %163 : vector<8x128xf32>
    %165 = vector.extract_strided_slice %164 {offsets = [0, 0], sizes = [8, 32], strides = [1, 1]} : vector<8x128xf32> to vector<8x32xf32>
    %166 = vector.extract_strided_slice %164 {offsets = [0, 32], sizes = [8, 32], strides = [1, 1]} : vector<8x128xf32> to vector<8x32xf32>
    %167 = vector.extract_strided_slice %160 {offsets = [0, 64], sizes = [8, 32], strides = [1, 1]} : vector<8x128xf32> to vector<8x32xf32>
    %168 = vector.extract_strided_slice %164 {offsets = [0, 96], sizes = [8, 32], strides = [1, 1]} : vector<8x128xf32> to vector<8x32xf32>
    %169 = arith.mulf %166, %149 : vector<8x32xf32>
    %170 = arith.mulf %165, %167 : vector<8x32xf32>
    %171 = arith.addf %169, %170 : vector<8x32xf32>
    %172 = math.tanh %171 : vector<8x32xf32>
    %173 = arith.mulf %168, %172 : vector<8x32xf32>
    %cst_53 = arith.constant 0.000000e+00 : f32
    %174 = vector.broadcast %cst_53 : f32 to vector<8x32xf32>
    %175 = arith.maximumf %173, %174 : vector<8x32xf32>
    %c224 = arith.constant 224 : index
    %c0_54 = arith.constant 0 : index
    %176 = vector.load %arg4[%c224, %c0_54] : memref<256x32xf32, #tpu.memory_space<vmem>>, vector<32x32xf32>
    %cst_55 = arith.constant dense<0.000000e+00> : vector<8x32xf32>
    %177 = tpu.matmul %175, %176, %cst_55 {dimension_numbers = #tpu.dot_dimension_numbers<[1], [0], [0], [1], [0, 0, 1, 1], [], []>} : vector<8x32xf32>, vector<32x32xf32>, vector<8x32xf32> -> vector<8x32xf32>
    %178 = arith.addf %156, %177 : vector<8x32xf32>
    %c0_56 = arith.constant 0 : index
    %c0_57 = arith.constant 0 : index
    %179 = vector.load %arg5[%c0_56, %c0_57] : memref<1x32xf32, #tpu.memory_space<vmem>>, vector<1x32xf32>
    %180 = vector.broadcast %179 : vector<1x32xf32> to vector<8x32xf32>
    %181 = arith.addf %178, %180 : vector<8x32xf32>
    %cst_58 = arith.constant 0.000000e+00 : f32
    %182 = vector.broadcast %cst_58 : f32 to vector<8x32xf32>
    %183 = arith.maximumf %181, %182 : vector<8x32xf32>
    %c0_59 = arith.constant 0 : index
    %c0_60 = arith.constant 0 : index
    %184 = vector.load %arg6[%c0_59, %c0_60] : memref<32x4xf32, #tpu.memory_space<vmem>>, vector<32x4xf32>
    %cst_61 = arith.constant dense<0.000000e+00> : vector<8x4xf32>
    %185 = tpu.matmul %183, %184, %cst_61 {dimension_numbers = #tpu.dot_dimension_numbers<[1], [0], [0], [1], [0, 0, 1, 1], [], []>} : vector<8x32xf32>, vector<32x4xf32>, vector<8x4xf32> -> vector<8x4xf32>
    %c0_62 = arith.constant 0 : index
    %c0_63 = arith.constant 0 : index
    %186 = vector.load %arg7[%c0_62, %c0_63] : memref<1x4xf32, #tpu.memory_space<vmem>>, vector<1x4xf32>
    %187 = vector.broadcast %186 : vector<1x4xf32> to vector<8x4xf32>
    %188 = arith.addf %185, %187 : vector<8x4xf32>
    %c0_64 = arith.constant 0 : index
    %c0_65 = arith.constant 0 : index
    %189 = vector.load %arg8[%c0_64, %c0_65] : memref<8x4xf32, #tpu.memory_space<vmem>>, vector<8x4xf32>
    tpu.vector_store %arg8[%c0_64, %c0_65], %188 {strides = array<i32>} : memref<8x4xf32, #tpu.memory_space<vmem>>, vector<8x4xf32>,
    return
  }
}

</mosaic_0001>

<llo_original>
// kernel: dqn_forward.1
$region0: #{dqn_forward.1}
  #allocation0 [shape = 'u32[]', space=smem, size = 0x4, offset = 0x4, fixed_abs, tag = 'smem constant byte address 0x4 - core index']
  #allocation1 [shape = 'u32[144,128]{1,0:T(1,128)}', space=vmem, size = 0x12000, scoped, tag = 'internal scratch']
  %s0 = inlined_call_operand.vmem [shape: f32[8,32], index: 0, kind: input, shape index: {}]
  %s1 = inlined_call_operand.vmem [shape: f32[32,1024], index: 1, kind: input, shape index: {}]
  %s2 = inlined_call_operand.vmem [shape: f32[32,128], index: 2, kind: input, shape index: {}]
  %s3 = inlined_call_operand.vmem [shape: f32[1,1024], index: 3, kind: input, shape index: {}]
  %s4 = inlined_call_operand.vmem [shape: f32[256,32], index: 4, kind: input, shape index: {}]
  %s5 = inlined_call_operand.vmem [shape: f32[1,32], index: 5, kind: input, shape index: {}]
  %s6 = inlined_call_operand.vmem [shape: f32[32,4], index: 6, kind: input, shape index: {}]
  %s7 = inlined_call_operand.vmem [shape: f32[1,4], index: 7, kind: input, shape index: {}]
  %s8 = inlined_call_operand.vmem [shape: f32[8,4], index: 8, kind: output, shape index: {}]
  %s9 = sld [smem:[#allocation0]]
  $region42: #{dqn_forward.1} parent=0
    _
  %s11 = ssub.s32 1, %s9
  %s12 = scalar_select 0, %s11, %s9
  // Predicated region
  $region2: #{dqn_forward.1} parent=0 // pred_check
    _
  $region3: #{dqn_forward.1} parent=0 // pred_check_branch
    %14 = sbr.rel (0) target = $region5
  $region4: #{dqn_forward.1} parent=0 // pred_region
    _
  $region5: #{dqn_forward.1} parent=0 // pred_fallthru
    _
  // Predicated region
  $region6: #{dqn_forward.1} parent=0 // pred_check
    _
  $region7: #{dqn_forward.1} parent=0 // pred_check_branch
    %16 = sbr.rel (0) target = $region9
  $region8: #{dqn_forward.1} parent=0 // pred_region
    _
  $region9: #{dqn_forward.1} parent=0 // pred_fallthru
    _
  // Predicated region
  $region10: #{dqn_forward.1} parent=0 // pred_check
    _
  $region11: #{dqn_forward.1} parent=0 // pred_check_branch
    %18 = sbr.rel (0) target = $region13
  $region12: #{dqn_forward.1} parent=0 // pred_region
    _
  $region13: #{dqn_forward.1} parent=0 // pred_fallthru
    _
  // Predicated region
  $region14: #{dqn_forward.1} parent=0 // pred_check
    _
  $region15: #{dqn_forward.1} parent=0 // pred_check_branch
    %20 = sbr.rel (0) target = $region17
  $region16: #{dqn_forward.1} parent=0 // pred_region
    _
  $region17: #{dqn_forward.1} parent=0 // pred_fallthru
    _
  // Predicated region
  $region18: #{dqn_forward.1} parent=0 // pred_check
    _
  $region19: #{dqn_forward.1} parent=0 // pred_check_branch
    %22 = sbr.rel (0) target = $region21
  $region20: #{dqn_forward.1} parent=0 // pred_region
    _
  $region21: #{dqn_forward.1} parent=0 // pred_fallthru
    _
  // Predicated region
  $region22: #{dqn_forward.1} parent=0 // pred_check
    _
  $region23: #{dqn_forward.1} parent=0 // pred_check_branch
    %24 = sbr.rel (0) target = $region25
  $region24: #{dqn_forward.1} parent=0 // pred_region
    _
  $region25: #{dqn_forward.1} parent=0 // pred_fallthru
    _
  // Predicated region
  $region26: #{dqn_forward.1} parent=0 // pred_check
    _
  $region27: #{dqn_forward.1} parent=0 // pred_check_branch
    %26 = sbr.rel (0) target = $region29
  $region28: #{dqn_forward.1} parent=0 // pred_region
    _
  $region29: #{dqn_forward.1} parent=0 // pred_fallthru
    _
  // Predicated region
  $region30: #{dqn_forward.1} parent=0 // pred_check
    _
  $region31: #{dqn_forward.1} parent=0 // pred_check_branch
    %28 = sbr.rel (0) target = $region33
  $region32: #{dqn_forward.1} parent=0 // pred_region
    _
  $region33: #{dqn_forward.1} parent=0 // pred_fallthru
    _
  %v29 = vld [vmem:[%s2] sm:$0xff]
  %v30 = vld [vmem:[%s2 + $0x8] sm:$0xff]
  %v31 = vld [vmem:[%s2 + $0x10] sm:$0xff]
  %v32 = vld [vmem:[%s2 + $0x18] sm:$0xff]
  %v33 = vld [vmem:[%s0] sm:$0xff]
  %v34 = vld [vmem:[%s1] sm:$0xff]
  %v35 = vld [vmem:[%s1 + $0x8] sm:$0xff]
  %v36 = vld [vmem:[%s1 + $0x10] sm:$0xff]
  %v37 = vld [vmem:[%s1 + $0x18] sm:$0xff]
  %v38 = vld [vmem:[%s1 + $0x20] sm:$0xff]
  %v39 = vld [vmem:[%s1 + $0x28] sm:$0xff]
  %v40 = vld [vmem:[%s1 + $0x30] sm:$0xff]
  %v41 = vld [vmem:[%s1 + $0x38] sm:$0xff]
  %v42 = vld [vmem:[%s1 + $0x40] sm:$0xff]
  %v43 = vld [vmem:[%s1 + $0x48] sm:$0xff]
  %v44 = vld [vmem:[%s1 + $0x50] sm:$0xff]
  %v45 = vld [vmem:[%s1 + $0x58] sm:$0xff]
  %v46 = vld [vmem:[%s1 + $0x60] sm:$0xff]
  %v47 = vld [vmem:[%s1 + $0x68] sm:$0xff]
  %v48 = vld [vmem:[%s1 + $0x70] sm:$0xff]
  %v49 = vld [vmem:[%s1 + $0x78] sm:$0xff]
  %v50 = vld [vmem:[%s1 + $0x80] sm:$0xff]
  %v51 = vld [vmem:[%s1 + $0x88] sm:$0xff]
  %v52 = vld [vmem:[%s1 + $0x90] sm:$0xff]
  %v53 = vld [vmem:[%s1 + $0x98] sm:$0xff]
  %v54 = vld [vmem:[%s1 + $0xa0] sm:$0xff]
  %v55 = vld [vmem:[%s1 + $0xa8] sm:$0xff]
  %v56 = vld [vmem:[%s1 + $0xb0] sm:$0xff]
  %v57 = vld [vmem:[%s1 + $0xb8] sm:$0xff]
  %v58 = vld [vmem:[%s1 + $0xc0] sm:$0xff]
  %v59 = vld [vmem:[%s1 + $0xc8] sm:$0xff]
  %v60 = vld [vmem:[%s1 + $0xd0] sm:$0xff]
  %v61 = vld [vmem:[%s1 + $0xd8] sm:$0xff]
  %v62 = vld [vmem:[%s1 + $0xe0] sm:$0xff]
  %v63 = vld [vmem:[%s1 + $0xe8] sm:$0xff]
  %v64 = vld [vmem:[%s1 + $0xf0] sm:$0xff]
  %v65 = vld [vmem:[%s1 + $0xf8] sm:$0xff]
  %v66 = vld [vmem:[%s3] sm:$0xff]
  %v68 = vlaneseq
  %v69 = vshrl.u32 %v68, 7
  %v70 = vsub.s32 0, %v69
  %v71 = vrot.slane %v66, %v70
  %v72 = vlaneseq
  %v73 = vshrl.u32 %v72, 7
  %v74 = vsub.s32 1, %v73
  %v75 = vrot.slane %v66, %v74
  %v76 = vlaneseq
  %v77 = vshrl.u32 %v76, 7
  %v78 = vsub.s32 2, %v77
  %v79 = vrot.slane %v66, %v78
  %v80 = vlaneseq
  %v81 = vshrl.u32 %v80, 7
  %v82 = vsub.s32 3, %v81
  %v83 = vrot.slane %v66, %v82
  %v84 = vlaneseq
  %v85 = vshrl.u32 %v84, 7
  %v86 = vsub.s32 4, %v85
  %v87 = vrot.slane %v66, %v86
  %v88 = vlaneseq
  %v89 = vshrl.u32 %v88, 7
  %v90 = vsub.s32 5, %v89
  %v91 = vrot.slane %v66, %v90
  %v92 = vlaneseq
  %v93 = vshrl.u32 %v92, 7
  %v94 = vsub.s32 6, %v93
  %v95 = vrot.slane %v66, %v94
  %v96 = vlaneseq
  %v97 = vshrl.u32 %v96, 7
  %v98 = vsub.s32 7, %v97
  %v99 = vrot.slane %v66, %v98
  %vm108 = vcmask 261120
  %v110 = vsel %vm108, %v33, 0
  %112 = vmatprep.subr.mxu0 0.0
  %113 = vmatpush1.msra.mxu0 0.0
  %114 = vmatprep.subr.mxu0 0.0
  %115 = vmatpush1.msra.mxu0 0.0
  %116 = vmatprep.subr.mxu0 0.0
  %117 = vmatpush1.msra.mxu0 0.0
  %118 = vmatprep.subr.mxu0 0.0
  %119 = vmatpush1.msra.mxu0 0.0
  %120 = vmatprep.subr.mxu0 0.0
  %121 = vmatpush1.msra.mxu0 0.0
  %122 = vmatprep.subr.mxu0 0.0
  %123 = vmatpush1.msra.mxu0 0.0
  %124 = vmatprep.subr.mxu0 0.0
  %125 = vmatpush1.msra.mxu0 0.0
  %126 = vmatprep.subr.mxu0 0.0
  %127 = vmatpush1.msra.mxu0 0.0
  %128 = vmatprep.subr.mxu0 0.0
  %129 = vmatpush1.msra.mxu0 0.0
  %130 = vmatprep.subr.mxu0 0.0
  %131 = vmatpush1.msra.mxu0 0.0
  %132 = vmatprep.subr.mxu0 0.0
  %133 = vmatpush1.msra.mxu0 0.0
  %134 = vmatprep.subr.mxu0 0.0
  %135 = vmatpush1.msra.mxu0 0.0
  %136 = vmatprep.subr.mxu0 %v59
  %137 = vmatpush1.msra.mxu0 %v58
  %138 = vmatprep.subr.mxu0 %v51
  %139 = vmatpush1.msra.mxu0 %v50
  %140 = vmatprep.subr.mxu0 %v43
  %141 = vmatpush1.msra.mxu0 %v42
  %142 = vmatprep.subr.mxu0 %v35
  %143 = vmatpush1.msra.mxu0 %v34
  %144 = vmatprep.subr.mxu0 0.0
  %145 = vmatpush2.msra.mxu0 0.0
  %146 = vmatprep.subr.mxu0 0.0
  %147 = vmatpush2.msra.mxu0 0.0
  %148 = vmatprep.subr.mxu0 0.0
  %149 = vmatpush2.msra.mxu0 0.0
  %150 = vmatprep.subr.mxu0 0.0
  %151 = vmatpush2.msra.mxu0 0.0
  %152 = vmatprep.subr.mxu0 0.0
  %153 = vmatpush2.msra.mxu0 0.0
  %154 = vmatprep.subr.mxu0 0.0
  %155 = vmatpush2.msra.mxu0 0.0
  %156 = vmatprep.subr.mxu0 0.0
  %157 = vmatpush2.msra.mxu0 0.0
  %158 = vmatprep.subr.mxu0 0.0
  %159 = vmatpush2.msra.mxu0 0.0
  %160 = vmatprep.subr.mxu0 0.0
  %161 = vmatpush2.msra.mxu0 0.0
  %162 = vmatprep.subr.mxu0 0.0
  %163 = vmatpush2.msra.mxu0 0.0
  %164 = vmatprep.subr.mxu0 0.0
  %165 = vmatpush2.msra.mxu0 0.0
  %166 = vmatprep.subr.mxu0 0.0
  %167 = vmatpush2.msra.mxu0 0.0
  %168 = vmatprep.subr.mxu0 0.0
  %169 = vmatpush2.msra.mxu0 0.0
  %170 = vmatprep.subr.mxu0 0.0
  %171 = vmatpush2.msra.mxu0 0.0
  %172 = vmatprep.subr.mxu0 0.0
  %173 = vmatpush2.msra.mxu0 0.0
  %174 = vmatprep.subr.mxu0 0.0
  %175 = vmatpush2.msra.mxu0 0.0
  %176 = vmatprep.mubr.f32.mxu0 0.0
  %177 = vmatmul.mubr.f32.gmra.mxu0 %v110
  %v178 = vpop.f32.mrf.mxu0
  %v179 = vadd.f32 %v71, %v178
  %v180 = vpop.f32.mrf.mxu0
  %v181 = vadd.f32 %v75, %v180
  %182 = vdwg.mxu0
  %183 = vmatprep.subr.mxu0 0.0
  %184 = vmatpush1.msra.mxu0 0.0
  %185 = vmatprep.subr.mxu0 0.0
  %186 = vmatpush1.msra.mxu0 0.0
  %187 = vmatprep.subr.mxu0 0.0
  %188 = vmatpush1.msra.mxu0 0.0
  %189 = vmatprep.subr.mxu0 0.0
  %190 = vmatpush1.msra.mxu0 0.0
  %191 = vmatprep.subr.mxu0 0.0
  %192 = vmatpush1.msra.mxu0 0.0
  %193 = vmatprep.subr.mxu0 0.0
  %194 = vmatpush1.msra.mxu0 0.0
  %195 = vmatprep.subr.mxu0 0.0
  %196 = vmatpush1.msra.mxu0 0.0
  %197 = vmatprep.subr.mxu0 0.0
  %198 = vmatpush1.msra.mxu0 0.0
  %199 = vmatprep.subr.mxu0 0.0
  %200 = vmatpush1.msra.mxu0 0.0
  %201 = vmatprep.subr.mxu0 0.0
  %202 = vmatpush1.msra.mxu0 0.0
  %203 = vmatprep.subr.mxu0 0.0
  %204 = vmatpush1.msra.mxu0 0.0
  %205 = vmatprep.subr.mxu0 0.0
  %206 = vmatpush1.msra.mxu0 0.0
  %207 = vmatprep.subr.mxu0 %v61
  %208 = vmatpush1.msra.mxu0 %v60
  %209 = vmatprep.subr.mxu0 %v53
  %210 = vmatpush1.msra.mxu0 %v52
  %211 = vmatprep.subr.mxu0 %v45
  %212 = vmatpush1.msra.mxu0 %v44
  %213 = vmatprep.subr.mxu0 %v37
  %214 = vmatpush1.msra.mxu0 %v36
  %215 = vmatprep.subr.mxu0 0.0
  %216 = vmatpush2.msra.mxu0 0.0
  %217 = vmatprep.subr.mxu0 0.0
  %218 = vmatpush2.msra.mxu0 0.0
  %219 = vmatprep.subr.mxu0 0.0
  %220 = vmatpush2.msra.mxu0 0.0
  %221 = vmatprep.subr.mxu0 0.0
  %222 = vmatpush2.msra.mxu0 0.0
  %223 = vmatprep.subr.mxu0 0.0
  %224 = vmatpush2.msra.mxu0 0.0
  %225 = vmatprep.subr.mxu0 0.0
  %226 = vmatpush2.msra.mxu0 0.0
  %227 = vmatprep.subr.mxu0 0.0
  %228 = vmatpush2.msra.mxu0 0.0
  %229 = vmatprep.subr.mxu0 0.0
  %230 = vmatpush2.msra.mxu0 0.0
  %231 = vmatprep.subr.mxu0 0.0
  %232 = vmatpush2.msra.mxu0 0.0
  %233 = vmatprep.subr.mxu0 0.0
  %234 = vmatpush2.msra.mxu0 0.0
  %235 = vmatprep.subr.mxu0 0.0
  %236 = vmatpush2.msra.mxu0 0.0
  %237 = vmatprep.subr.mxu0 0.0
  %238 = vmatpush2.msra.mxu0 0.0
  %239 = vmatprep.subr.mxu0 0.0
  %240 = vmatpush2.msra.mxu0 0.0
  %241 = vmatprep.subr.mxu0 0.0
  %242 = vmatpush2.msra.mxu0 0.0
  %243 = vmatprep.subr.mxu0 0.0
  %244 = vmatpush2.msra.mxu0 0.0
  %245 = vmatprep.subr.mxu0 0.0
  %246 = vmatpush2.msra.mxu0 0.0
  %247 = vmatprep.mubr.f32.mxu0 0.0
  %248 = vmatmul.mubr.f32.gmra.mxu0 %v110
  %v249 = vpop.f32.mrf.mxu0
  %v250 = vadd.f32 %v79, %v249
  %v251 = vpop.f32.mrf.mxu0
  %v252 = vadd.f32 %v83, %v251
  %253 = vdwg.mxu0
  %254 = vmatprep.subr.mxu0 0.0
  %255 = vmatpush1.msra.mxu0 0.0
  %256 = vmatprep.subr.mxu0 0.0
  %257 = vmatpush1.msra.mxu0 0.0
  %258 = vmatprep.subr.mxu0 0.0
  %259 = vmatpush1.msra.mxu0 0.0
  %260 = vmatprep.subr.mxu0 0.0
  %261 = vmatpush1.msra.mxu0 0.0
  %262 = vmatprep.subr.mxu0 0.0
  %263 = vmatpush1.msra.mxu0 0.0
  %264 = vmatprep.subr.mxu0 0.0
  %265 = vmatpush1.msra.mxu0 0.0
  %266 = vmatprep.subr.mxu0 0.0
  %267 = vmatpush1.msra.mxu0 0.0
  %268 = vmatprep.subr.mxu0 0.0
  %269 = vmatpush1.msra.mxu0 0.0
  %270 = vmatprep.subr.mxu0 0.0
  %271 = vmatpush1.msra.mxu0 0.0
  %272 = vmatprep.subr.mxu0 0.0
  %273 = vmatpush1.msra.mxu0 0.0
  %274 = vmatprep.subr.mxu0 0.0
  %275 = vmatpush1.msra.mxu0 0.0
  %276 = vmatprep.subr.mxu0 0.0
  %277 = vmatpush1.msra.mxu0 0.0
  %278 = vmatprep.subr.mxu0 %v63
  %279 = vmatpush1.msra.mxu0 %v62
  %280 = vmatprep.subr.mxu0 %v55
  %281 = vmatpush1.msra.mxu0 %v54
  %282 = vmatprep.subr.mxu0 %v47
  %283 = vmatpush1.msra.mxu0 %v46
  %284 = vmatprep.subr.mxu0 %v39
  %285 = vmatpush1.msra.mxu0 %v38
  %286 = vmatprep.subr.mxu0 0.0
  %287 = vmatpush2.msra.mxu0 0.0
  %288 = vmatprep.subr.mxu0 0.0
  %289 = vmatpush2.msra.mxu0 0.0
  %290 = vmatprep.subr.mxu0 0.0
  %291 = vmatpush2.msra.mxu0 0.0
  %292 = vmatprep.subr.mxu0 0.0
  %293 = vmatpush2.msra.mxu0 0.0
  %294 = vmatprep.subr.mxu0 0.0
  %295 = vmatpush2.msra.mxu0 0.0
  %296 = vmatprep.subr.mxu0 0.0
  %297 = vmatpush2.msra.mxu0 0.0
  %298 = vmatprep.subr.mxu0 0.0
  %299 = vmatpush2.msra.mxu0 0.0
  %300 = vmatprep.subr.mxu0 0.0
  %301 = vmatpush2.msra.mxu0 0.0
  %302 = vmatprep.subr.mxu0 0.0
  %303 = vmatpush2.msra.mxu0 0.0
  %304 = vmatprep.subr.mxu0 0.0
  %305 = vmatpush2.msra.mxu0 0.0
  %306 = vmatprep.subr.mxu0 0.0
  %307 = vmatpush2.msra.mxu0 0.0
  %308 = vmatprep.subr.mxu0 0.0
  %309 = vmatpush2.msra.mxu0 0.0
  %310 = vmatprep.subr.mxu0 0.0
  %311 = vmatpush2.msra.mxu0 0.0
  %312 = vmatprep.subr.mxu0 0.0
  %313 = vmatpush2.msra.mxu0 0.0
  %314 = vmatprep.subr.mxu0 0.0
  %315 = vmatpush2.msra.mxu0 0.0
  %316 = vmatprep.subr.mxu0 0.0
  %317 = vmatpush2.msra.mxu0 0.0
  %318 = vmatprep.mubr.f32.mxu0 0.0
  %319 = vmatmul.mubr.f32.gmra.mxu0 %v110
  %v320 = vpop.f32.mrf.mxu0
  %v321 = vadd.f32 %v87, %v320
  %v322 = vpop.f32.mrf.mxu0
  %v323 = vadd.f32 %v91, %v322
  %324 = vdwg.mxu0
  %325 = vmatprep.subr.mxu0 0.0
  %326 = vmatpush1.msra.mxu0 0.0
  %327 = vmatprep.subr.mxu0 0.0
  %328 = vmatpush1.msra.mxu0 0.0
  %329 = vmatprep.subr.mxu0 0.0
  %330 = vmatpush1.msra.mxu0 0.0
  %331 = vmatprep.subr.mxu0 0.0
  %332 = vmatpush1.msra.mxu0 0.0
  %333 = vmatprep.subr.mxu0 0.0
  %334 = vmatpush1.msra.mxu0 0.0
  %335 = vmatprep.subr.mxu0 0.0
  %336 = vmatpush1.msra.mxu0 0.0
  %337 = vmatprep.subr.mxu0 0.0
  %338 = vmatpush1.msra.mxu0 0.0
  %339 = vmatprep.subr.mxu0 0.0
  %340 = vmatpush1.msra.mxu0 0.0
  %341 = vmatprep.subr.mxu0 0.0
  %342 = vmatpush1.msra.mxu0 0.0
  %343 = vmatprep.subr.mxu0 0.0
  %344 = vmatpush1.msra.mxu0 0.0
  %345 = vmatprep.subr.mxu0 0.0
  %346 = vmatpush1.msra.mxu0 0.0
  %347 = vmatprep.subr.mxu0 0.0
  %348 = vmatpush1.msra.mxu0 0.0
  %349 = vmatprep.subr.mxu0 %v65
  %350 = vmatpush1.msra.mxu0 %v64
  %351 = vmatprep.subr.mxu0 %v57
  %352 = vmatpush1.msra.mxu0 %v56
  %353 = vmatprep.subr.mxu0 %v49
  %354 = vmatpush1.msra.mxu0 %v48
  %355 = vmatprep.subr.mxu0 %v41
  %356 = vmatpush1.msra.mxu0 %v40
  %357 = vmatprep.subr.mxu0 0.0
  %358 = vmatpush2.msra.mxu0 0.0
  %359 = vmatprep.subr.mxu0 0.0
  %360 = vmatpush2.msra.mxu0 0.0
  %361 = vmatprep.subr.mxu0 0.0
  %362 = vmatpush2.msra.mxu0 0.0
  %363 = vmatprep.subr.mxu0 0.0
  %364 = vmatpush2.msra.mxu0 0.0
  %365 = vmatprep.subr.mxu0 0.0
  %366 = vmatpush2.msra.mxu0 0.0
  %367 = vmatprep.subr.mxu0 0.0
  %368 = vmatpush2.msra.mxu0 0.0
  %369 = vmatprep.subr.mxu0 0.0
  %370 = vmatpush2.msra.mxu0 0.0
  %371 = vmatprep.subr.mxu0 0.0
  %372 = vmatpush2.msra.mxu0 0.0
  %373 = vmatprep.subr.mxu0 0.0
  %374 = vmatpush2.msra.mxu0 0.0
  %375 = vmatprep.subr.mxu0 0.0
  %376 = vmatpush2.msra.mxu0 0.0
  %377 = vmatprep.subr.mxu0 0.0
  %378 = vmatpush2.msra.mxu0 0.0
  %379 = vmatprep.subr.mxu0 0.0
  %380 = vmatpush2.msra.mxu0 0.0
  %381 = vmatprep.subr.mxu0 0.0
  %382 = vmatpush2.msra.mxu0 0.0
  %383 = vmatprep.subr.mxu0 0.0
  %384 = vmatpush2.msra.mxu0 0.0
  %385 = vmatprep.subr.mxu0 0.0
  %386 = vmatpush2.msra.mxu0 0.0
  %387 = vmatprep.subr.mxu0 0.0
  %388 = vmatpush2.msra.mxu0 0.0
  %389 = vmatprep.mubr.f32.mxu0 0.0
  %390 = vmatmul.mubr.f32.gmra.mxu0 %v110
  %v391 = vpop.f32.mrf.mxu0
  %v392 = vadd.f32 %v95, %v391
  %v393 = vpop.f32.mrf.mxu0
  %v394 = vadd.f32 %v99, %v393
  %395 = vdwg.mxu0
  %v396 = vtanh.pop %v179
  %v397 = vmul.f32 %v396, 0.5
  %v398 = vadd.f32 %v397, 0.5
  %400 = vrot.lane.b32.xlu0 %v396, 64
  %v401 = vpop.permute.xlu0 %400
  %v403 = vmul.f32 %v398, %v401
  %v404 = vtanh.pop %v403
  %406 = vrot.lane.b32.xlu0 %v404, 96
  %v407 = vpop.permute.xlu0 %406
  %v409 = vmul.f32 %v398, %v407
  %v410 = vmax.f32 %v409, 0.0
  %v411 = vld [vmem:[%s4] sm:$0xff]
  %v412 = vld [vmem:[%s4 + $0x8] sm:$0xff]
  %v413 = vld [vmem:[%s4 + $0x10] sm:$0xff]
  %v414 = vld [vmem:[%s4 + $0x18] sm:$0xff]
  %416 = vrot.lane.b32.xlu0 %v409, 32
  %v417 = vpop.permute.xlu0 %416
  %v418 = vsel %vm108, %v417, 0
  %420 = vmatprep.subr.mxu0 0.0
  %421 = vmatpush1.msra.mxu0 0.0
  %422 = vmatprep.subr.mxu0 0.0
  %423 = vmatpush1.msra.mxu0 0.0
  %424 = vmatprep.subr.mxu0 0.0
  %425 = vmatpush1.msra.mxu0 0.0
  %426 = vmatprep.subr.mxu0 0.0
  %427 = vmatpush1.msra.mxu0 0.0
  %428 = vmatprep.subr.mxu0 0.0
  %429 = vmatpush1.msra.mxu0 0.0
  %430 = vmatprep.subr.mxu0 0.0
  %431 = vmatpush1.msra.mxu0 0.0
  %432 = vmatprep.subr.mxu0 0.0
  %433 = vmatpush1.msra.mxu0 0.0
  %434 = vmatprep.subr.mxu0 0.0
  %435 = vmatpush1.msra.mxu0 0.0
  %436 = vmatprep.subr.mxu0 0.0
  %437 = vmatpush1.msra.mxu0 0.0
  %438 = vmatprep.subr.mxu0 0.0
  %439 = vmatpush1.msra.mxu0 0.0
  %440 = vmatprep.subr.mxu0 0.0
  %441 = vmatpush1.msra.mxu0 0.0
  %442 = vmatprep.subr.mxu0 0.0
  %443 = vmatpush1.msra.mxu0 0.0
  %444 = vmatprep.subr.mxu0 0.0
  %445 = vmatpush1.msra.mxu0 %v32
  %446 = vmatprep.subr.mxu0 0.0
  %447 = vmatpush1.msra.mxu0 %v31
  %448 = vmatprep.subr.mxu0 0.0
  %449 = vmatpush1.msra.mxu0 %v30
  %450 = vmatprep.subr.mxu0 0.0
  %451 = vmatpush1.msra.mxu0 %v29
  %452 = vmatprep.subr.mxu0 0.0
  %453 = vmatpush2.msra.mxu0 0.0
  %454 = vmatprep.subr.mxu0 0.0
  %455 = vmatpush2.msra.mxu0 0.0
  %456 = vmatprep.subr.mxu0 0.0
  %457 = vmatpush2.msra.mxu0 0.0
  %458 = vmatprep.subr.mxu0 0.0
  %459 = vmatpush2.msra.mxu0 0.0
  %460 = vmatprep.subr.mxu0 0.0
  %461 = vmatpush2.msra.mxu0 0.0
  %462 = vmatprep.subr.mxu0 0.0
  %463 = vmatpush2.msra.mxu0 0.0
  %464 = vmatprep.subr.mxu0 0.0
  %465 = vmatpush2.msra.mxu0 0.0
  %466 = vmatprep.subr.mxu0 0.0
  %467 = vmatpush2.msra.mxu0 0.0
  %468 = vmatprep.subr.mxu0 0.0
  %469 = vmatpush2.msra.mxu0 0.0
  %470 = vmatprep.subr.mxu0 0.0
  %471 = vmatpush2.msra.mxu0 0.0
  %472 = vmatprep.subr.mxu0 0.0
  %473 = vmatpush2.msra.mxu0 0.0
  %474 = vmatprep.subr.mxu0 0.0
  %475 = vmatpush2.msra.mxu0 0.0
  %476 = vmatprep.subr.mxu0 0.0
  %477 = vmatpush2.msra.mxu0 0.0
  %478 = vmatprep.subr.mxu0 0.0
  %479 = vmatpush2.msra.mxu0 0.0
  %480 = vmatprep.subr.mxu0 0.0
  %481 = vmatpush2.msra.mxu0 0.0
  %482 = vmatprep.subr.mxu0 0.0
  %483 = vmatpush2.msra.mxu0 0.0
  %484 = vmatprep.mubr.f32.mxu0 0.0
  %485 = vmatmul.mubr.f32.gmra.mxu0 %v418
  %v486 = vpop.f32.mrf.mxu0
  %v487 = vadd.f32 0.0, %v486
  %v488 = vpop.f32.mrf.mxu0
  %489 = vdwg.mxu0
  %v490 = vadd.f32 %v181, %v487
  %v491 = vtanh.pop %v490
  %v492 = vmul.f32 %v491, 0.5
  %v493 = vadd.f32 %v492, 0.5
  %495 = vrot.lane.b32.xlu0 %v403, 32
  %v496 = vpop.permute.xlu0 %495
  %v498 = vmul.f32 %v493, %v496
  %500 = vrot.lane.b32.xlu0 %v491, 64
  %v501 = vpop.permute.xlu0 %500
  %v503 = vmul.f32 %v493, %v501
  %505 = vrot.lane.b32.xlu0 %v503, 32
  %v506 = vpop.permute.xlu0 %505
  %v508 = vadd.f32 %v498, %v506
  %v509 = vtanh.pop %v508
  %511 = vrot.lane.b32.xlu0 %v509, 64
  %v512 = vpop.permute.xlu0 %511
  %v514 = vmul.f32 %v493, %v512
  %v515 = vmax.f32 %v514, 0.0
  %v516 = vld [vmem:[%s4 + $0x20] sm:$0xff]
  %v517 = vld [vmem:[%s4 + $0x28] sm:$0xff]
  %v518 = vld [vmem:[%s4 + $0x30] sm:$0xff]
  %v519 = vld [vmem:[%s4 + $0x38] sm:$0xff]
  %521 = vrot.lane.b32.xlu0 %v515, 32
  %v522 = vpop.permute.xlu0 %521
  %v523 = vsel %vm108, %v522, 0
  %525 = vmatprep.subr.mxu0 0.0
  %526 = vmatpush1.msra.mxu0 0.0
  %527 = vmatprep.subr.mxu0 0.0
  %528 = vmatpush1.msra.mxu0 0.0
  %529 = vmatprep.subr.mxu0 0.0
  %530 = vmatpush1.msra.mxu0 0.0
  %531 = vmatprep.subr.mxu0 0.0
  %532 = vmatpush1.msra.mxu0 0.0
  %533 = vmatprep.subr.mxu0 0.0
  %534 = vmatpush1.msra.mxu0 0.0
  %535 = vmatprep.subr.mxu0 0.0
  %536 = vmatpush1.msra.mxu0 0.0
  %537 = vmatprep.subr.mxu0 0.0
  %538 = vmatpush1.msra.mxu0 0.0
  %539 = vmatprep.subr.mxu0 0.0
  %540 = vmatpush1.msra.mxu0 0.0
  %541 = vmatprep.subr.mxu0 0.0
  %542 = vmatpush1.msra.mxu0 0.0
  %543 = vmatprep.subr.mxu0 0.0
  %544 = vmatpush1.msra.mxu0 0.0
  %545 = vmatprep.subr.mxu0 0.0
  %546 = vmatpush1.msra.mxu0 0.0
  %547 = vmatprep.subr.mxu0 0.0
  %548 = vmatpush1.msra.mxu0 0.0
  %549 = vmatprep.subr.mxu0 0.0
  %550 = vmatpush1.msra.mxu0 %v519
  %551 = vmatprep.subr.mxu0 0.0
  %552 = vmatpush1.msra.mxu0 %v518
  %553 = vmatprep.subr.mxu0 0.0
  %554 = vmatpush1.msra.mxu0 %v517
  %555 = vmatprep.subr.mxu0 0.0
  %556 = vmatpush1.msra.mxu0 %v516
  %557 = vmatprep.subr.mxu0 0.0
  %558 = vmatpush2.msra.mxu0 0.0
  %559 = vmatprep.subr.mxu0 0.0
  %560 = vmatpush2.msra.mxu0 0.0
  %561 = vmatprep.subr.mxu0 0.0
  %562 = vmatpush2.msra.mxu0 0.0
  %563 = vmatprep.subr.mxu0 0.0
  %564 = vmatpush2.msra.mxu0 0.0
  %565 = vmatprep.subr.mxu0 0.0
  %566 = vmatpush2.msra.mxu0 0.0
  %567 = vmatprep.subr.mxu0 0.0
  %568 = vmatpush2.msra.mxu0 0.0
  %569 = vmatprep.subr.mxu0 0.0
  %570 = vmatpush2.msra.mxu0 0.0
  %571 = vmatprep.subr.mxu0 0.0
  %572 = vmatpush2.msra.mxu0 0.0
  %573 = vmatprep.subr.mxu0 0.0
  %574 = vmatpush2.msra.mxu0 0.0
  %575 = vmatprep.subr.mxu0 0.0
  %576 = vmatpush2.msra.mxu0 0.0
  %577 = vmatprep.subr.mxu0 0.0
  %578 = vmatpush2.msra.mxu0 0.0
  %579 = vmatprep.subr.mxu0 0.0
  %580 = vmatpush2.msra.mxu0 0.0
  %581 = vmatprep.subr.mxu0 0.0
  %582 = vmatpush2.msra.mxu0 0.0
  %583 = vmatprep.subr.mxu0 0.0
  %584 = vmatpush2.msra.mxu0 0.0
  %585 = vmatprep.subr.mxu0 0.0
  %586 = vmatpush2.msra.mxu0 0.0
  %587 = vmatprep.subr.mxu0 0.0
  %588 = vmatpush2.msra.mxu0 0.0
  %589 = vmatprep.mubr.f32.mxu0 0.0
  %590 = vmatmul.mubr.f32.gmra.mxu0 %v523
  %v591 = vpop.f32.mrf.mxu0
  %v592 = vadd.f32 0.0, %v591
  %v593 = vpop.f32.mrf.mxu0
  %594 = vdwg.mxu0
  %596 = vrot.lane.b32.xlu0 %v410, 32
  %v597 = vpop.permute.xlu0 %596
  %v598 = vsel %vm108, %v597, 0
  %600 = vmatprep.subr.mxu0 0.0
  %601 = vmatpush1.msra.mxu0 0.0
  %602 = vmatprep.subr.mxu0 0.0
  %603 = vmatpush1.msra.mxu0 0.0
  %604 = vmatprep.subr.mxu0 0.0
  %605 = vmatpush1.msra.mxu0 0.0
  %606 = vmatprep.subr.mxu0 0.0
  %607 = vmatpush1.msra.mxu0 0.0
  %608 = vmatprep.subr.mxu0 0.0
  %609 = vmatpush1.msra.mxu0 0.0
  %610 = vmatprep.subr.mxu0 0.0
  %611 = vmatpush1.msra.mxu0 0.0
  %612 = vmatprep.subr.mxu0 0.0
  %613 = vmatpush1.msra.mxu0 0.0
  %614 = vmatprep.subr.mxu0 0.0
  %615 = vmatpush1.msra.mxu0 0.0
  %616 = vmatprep.subr.mxu0 0.0
  %617 = vmatpush1.msra.mxu0 0.0
  %618 = vmatprep.subr.mxu0 0.0
  %619 = vmatpush1.msra.mxu0 0.0
  %620 = vmatprep.subr.mxu0 0.0
  %621 = vmatpush1.msra.mxu0 0.0
  %622 = vmatprep.subr.mxu0 0.0
  %623 = vmatpush1.msra.mxu0 0.0
  %624 = vmatprep.subr.mxu0 0.0
  %625 = vmatpush1.msra.mxu0 %v414
  %626 = vmatprep.subr.mxu0 0.0
  %627 = vmatpush1.msra.mxu0 %v413
  %628 = vmatprep.subr.mxu0 0.0
  %629 = vmatpush1.msra.mxu0 %v412
  %630 = vmatprep.subr.mxu0 0.0
  %631 = vmatpush1.msra.mxu0 %v411
  %632 = vmatprep.subr.mxu0 0.0
  %633 = vmatpush2.msra.mxu0 0.0
  %634 = vmatprep.subr.mxu0 0.0
  %635 = vmatpush2.msra.mxu0 0.0
  %636 = vmatprep.subr.mxu0 0.0
  %637 = vmatpush2.msra.mxu0 0.0
  %638 = vmatprep.subr.mxu0 0.0
  %639 = vmatpush2.msra.mxu0 0.0
  %640 = vmatprep.subr.mxu0 0.0
  %641 = vmatpush2.msra.mxu0 0.0
  %642 = vmatprep.subr.mxu0 0.0
  %643 = vmatpush2.msra.mxu0 0.0
  %644 = vmatprep.subr.mxu0 0.0
  %645 = vmatpush2.msra.mxu0 0.0
  %646 = vmatprep.subr.mxu0 0.0
  %647 = vmatpush2.msra.mxu0 0.0
  %648 = vmatprep.subr.mxu0 0.0
  %649 = vmatpush2.msra.mxu0 0.0
  %650 = vmatprep.subr.mxu0 0.0
  %651 = vmatpush2.msra.mxu0 0.0
  %652 = vmatprep.subr.mxu0 0.0
  %653 = vmatpush2.msra.mxu0 0.0
  %654 = vmatprep.subr.mxu0 0.0
  %655 = vmatpush2.msra.mxu0 0.0
  %656 = vmatprep.subr.mxu0 0.0
  %657 = vmatpush2.msra.mxu0 0.0
  %658 = vmatprep.subr.mxu0 0.0
  %659 = vmatpush2.msra.mxu0 0.0
  %660 = vmatprep.subr.mxu0 0.0
  %661 = vmatpush2.msra.mxu0 0.0
  %662 = vmatprep.subr.mxu0 0.0
  %663 = vmatpush2.msra.mxu0 0.0
  %664 = vmatprep.mubr.f32.mxu0 0.0
  %665 = vmatmul.mubr.f32.gmra.mxu0 %v598
  %v666 = vpop.f32.mrf.mxu0
  %v667 = vadd.f32 %v592, %v666
  %v668 = vpop.f32.mrf.mxu0
  %669 = vdwg.mxu0
  %671 = vrot.lane.b32.xlu0 %v514, 32
  %v672 = vpop.permute.xlu0 %671
  %v673 = vsel %vm108, %v672, 0
  %675 = vmatprep.subr.mxu0 0.0
  %676 = vmatpush1.msra.mxu0 0.0
  %677 = vmatprep.subr.mxu0 0.0
  %678 = vmatpush1.msra.mxu0 0.0
  %679 = vmatprep.subr.mxu0 0.0
  %680 = vmatpush1.msra.mxu0 0.0
  %681 = vmatprep.subr.mxu0 0.0
  %682 = vmatpush1.msra.mxu0 0.0
  %683 = vmatprep.subr.mxu0 0.0
  %684 = vmatpush1.msra.mxu0 0.0
  %685 = vmatprep.subr.mxu0 0.0
  %686 = vmatpush1.msra.mxu0 0.0
  %687 = vmatprep.subr.mxu0 0.0
  %688 = vmatpush1.msra.mxu0 0.0
  %689 = vmatprep.subr.mxu0 0.0
  %690 = vmatpush1.msra.mxu0 0.0
  %691 = vmatprep.subr.mxu0 0.0
  %692 = vmatpush1.msra.mxu0 0.0
  %693 = vmatprep.subr.mxu0 0.0
  %694 = vmatpush1.msra.mxu0 0.0
  %695 = vmatprep.subr.mxu0 0.0
  %696 = vmatpush1.msra.mxu0 0.0
  %697 = vmatprep.subr.mxu0 0.0
  %698 = vmatpush1.msra.mxu0 0.0
  %699 = vmatprep.subr.mxu0 0.0
  %700 = vmatpush1.msra.mxu0 %v32
  %701 = vmatprep.subr.mxu0 0.0
  %702 = vmatpush1.msra.mxu0 %v31
  %703 = vmatprep.subr.mxu0 0.0
  %704 = vmatpush1.msra.mxu0 %v30
  %705 = vmatprep.subr.mxu0 0.0
  %706 = vmatpush1.msra.mxu0 %v29
  %707 = vmatprep.subr.mxu0 0.0
  %708 = vmatpush2.msra.mxu0 0.0
  %709 = vmatprep.subr.mxu0 0.0
  %710 = vmatpush2.msra.mxu0 0.0
  %711 = vmatprep.subr.mxu0 0.0
  %712 = vmatpush2.msra.mxu0 0.0
  %713 = vmatprep.subr.mxu0 0.0
  %714 = vmatpush2.msra.mxu0 0.0
  %715 = vmatprep.subr.mxu0 0.0
  %716 = vmatpush2.msra.mxu0 0.0
  %717 = vmatprep.subr.mxu0 0.0
  %718 = vmatpush2.msra.mxu0 0.0
  %719 = vmatprep.subr.mxu0 0.0
  %720 = vmatpush2.msra.mxu0 0.0
  %721 = vmatprep.subr.mxu0 0.0
  %722 = vmatpush2.msra.mxu0 0.0
  %723 = vmatprep.subr.mxu0 0.0
  %724 = vmatpush2.msra.mxu0 0.0
  %725 = vmatprep.subr.mxu0 0.0
  %726 = vmatpush2.msra.mxu0 0.0
  %727 = vmatprep.subr.mxu0 0.0
  %728 = vmatpush2.msra.mxu0 0.0
  %729 = vmatprep.subr.mxu0 0.0
  %730 = vmatpush2.msra.mxu0 0.0
  %731 = vmatprep.subr.mxu0 0.0
  %732 = vmatpush2.msra.mxu0 0.0
  %733 = vmatprep.subr.mxu0 0.0
  %734 = vmatpush2.msra.mxu0 0.0
  %735 = vmatprep.subr.mxu0 0.0
  %736 = vmatpush2.msra.mxu0 0.0
  %737 = vmatprep.subr.mxu0 0.0
  %738 = vmatpush2.msra.mxu0 0.0
  %739 = vmatprep.mubr.f32.mxu0 0.0
  %740 = vmatmul.mubr.f32.gmra.mxu0 %v673
  %v741 = vpop.f32.mrf.mxu0
  %v742 = vadd.f32 0.0, %v741
  %v743 = vpop.f32.mrf.mxu0
  %744 = vdwg.mxu0
  %v745 = vadd.f32 %v250, %v742
  %v746 = vtanh.pop %v745
  %v747 = vmul.f32 %v746, 0.5
  %v748 = vadd.f32 %v747, 0.5
  %v749 = vmul.f32 %v748, %v508
  %751 = vrot.lane.b32.xlu0 %v746, 64
  %v752 = vpop.permute.xlu0 %751
  %v754 = vmul.f32 %v748, %v752
  %756 = vrot.lane.b32.xlu0 %v754, 32
  %v757 = vpop.permute.xlu0 %756
  %v759 = vadd.f32 %v749, %v757
  %v760 = vtanh.pop %v759
  %762 = vrot.lane.b32.xlu0 %v760, 64
  %v763 = vpop.permute.xlu0 %762
  %v765 = vmul.f32 %v748, %v763
  %v766 = vmax.f32 %v765, 0.0
  %v767 = vld [vmem:[%s4 + $0x40] sm:$0xff]
  %v768 = vld [vmem:[%s4 + $0x48] sm:$0xff]
  %v769 = vld [vmem:[%s4 + $0x50] sm:$0xff]
  %v770 = vld [vmem:[%s4 + $0x58] sm:$0xff]
  %772 = vrot.lane.b32.xlu0 %v766, 32
  %v773 = vpop.permute.xlu0 %772
  %v774 = vsel %vm108, %v773, 0
  %776 = vmatprep.subr.mxu0 0.0
  %777 = vmatpush1.msra.mxu0 0.0
  %778 = vmatprep.subr.mxu0 0.0
  %779 = vmatpush1.msra.mxu0 0.0
  %780 = vmatprep.subr.mxu0 0.0
  %781 = vmatpush1.msra.mxu0 0.0
  %782 = vmatprep.subr.mxu0 0.0
  %783 = vmatpush1.msra.mxu0 0.0
  %784 = vmatprep.subr.mxu0 0.0
  %785 = vmatpush1.msra.mxu0 0.0
  %786 = vmatprep.subr.mxu0 0.0
  %787 = vmatpush1.msra.mxu0 0.0
  %788 = vmatprep.subr.mxu0 0.0
  %789 = vmatpush1.msra.mxu0 0.0
  %790 = vmatprep.subr.mxu0 0.0
  %791 = vmatpush1.msra.mxu0 0.0
  %792 = vmatprep.subr.mxu0 0.0
  %793 = vmatpush1.msra.mxu0 0.0
  %794 = vmatprep.subr.mxu0 0.0
  %795 = vmatpush1.msra.mxu0 0.0
  %796 = vmatprep.subr.mxu0 0.0
  %797 = vmatpush1.msra.mxu0 0.0
  %798 = vmatprep.subr.mxu0 0.0
  %799 = vmatpush1.msra.mxu0 0.0
  %800 = vmatprep.subr.mxu0 0.0
  %801 = vmatpush1.msra.mxu0 %v770
  %802 = vmatprep.subr.mxu0 0.0
  %803 = vmatpush1.msra.mxu0 %v769
  %804 = vmatprep.subr.mxu0 0.0
  %805 = vmatpush1.msra.mxu0 %v768
  %806 = vmatprep.subr.mxu0 0.0
  %807 = vmatpush1.msra.mxu0 %v767
  %808 = vmatprep.subr.mxu0 0.0
  %809 = vmatpush2.msra.mxu0 0.0
  %810 = vmatprep.subr.mxu0 0.0
  %811 = vmatpush2.msra.mxu0 0.0
  %812 = vmatprep.subr.mxu0 0.0
  %813 = vmatpush2.msra.mxu0 0.0
  %814 = vmatprep.subr.mxu0 0.0
  %815 = vmatpush2.msra.mxu0 0.0
  %816 = vmatprep.subr.mxu0 0.0
  %817 = vmatpush2.msra.mxu0 0.0
  %818 = vmatprep.subr.mxu0 0.0
  %819 = vmatpush2.msra.mxu0 0.0
  %820 = vmatprep.subr.mxu0 0.0
  %821 = vmatpush2.msra.mxu0 0.0
  %822 = vmatprep.subr.mxu0 0.0
  %823 = vmatpush2.msra.mxu0 0.0
  %824 = vmatprep.subr.mxu0 0.0
  %825 = vmatpush2.msra.mxu0 0.0
  %826 = vmatprep.subr.mxu0 0.0
  %827 = vmatpush2.msra.mxu0 0.0
  %828 = vmatprep.subr.mxu0 0.0
  %829 = vmatpush2.msra.mxu0 0.0
  %830 = vmatprep.subr.mxu0 0.0
  %831 = vmatpush2.msra.mxu0 0.0
  %832 = vmatprep.subr.mxu0 0.0
  %833 = vmatpush2.msra.mxu0 0.0
  %834 = vmatprep.subr.mxu0 0.0
  %835 = vmatpush2.msra.mxu0 0.0
  %836 = vmatprep.subr.mxu0 0.0
  %837 = vmatpush2.msra.mxu0 0.0
  %838 = vmatprep.subr.mxu0 0.0
  %839 = vmatpush2.msra.mxu0 0.0
  %840 = vmatprep.mubr.f32.mxu0 0.0
  %841 = vmatmul.mubr.f32.gmra.mxu0 %v774
  %v842 = vpop.f32.mrf.mxu0
  %v843 = vadd.f32 0.0, %v842
  %v844 = vpop.f32.mrf.mxu0
  %845 = vdwg.mxu0
  %v846 = vadd.f32 %v667, %v843
  %848 = vrot.lane.b32.xlu0 %v765, 32
  %v849 = vpop.permute.xlu0 %848
  %v850 = vsel %vm108, %v849, 0
  %852 = vmatprep.subr.mxu0 0.0
  %853 = vmatpush1.msra.mxu0 0.0
  %854 = vmatprep.subr.mxu0 0.0
  %855 = vmatpush1.msra.mxu0 0.0
  %856 = vmatprep.subr.mxu0 0.0
  %857 = vmatpush1.msra.mxu0 0.0
  %858 = vmatprep.subr.mxu0 0.0
  %859 = vmatpush1.msra.mxu0 0.0
  %860 = vmatprep.subr.mxu0 0.0
  %861 = vmatpush1.msra.mxu0 0.0
  %862 = vmatprep.subr.mxu0 0.0
  %863 = vmatpush1.msra.mxu0 0.0
  %864 = vmatprep.subr.mxu0 0.0
  %865 = vmatpush1.msra.mxu0 0.0
  %866 = vmatprep.subr.mxu0 0.0
  %867 = vmatpush1.msra.mxu0 0.0
  %868 = vmatprep.subr.mxu0 0.0
  %869 = vmatpush1.msra.mxu0 0.0
  %870 = vmatprep.subr.mxu0 0.0
  %871 = vmatpush1.msra.mxu0 0.0
  %872 = vmatprep.subr.mxu0 0.0
  %873 = vmatpush1.msra.mxu0 0.0
  %874 = vmatprep.subr.mxu0 0.0
  %875 = vmatpush1.msra.mxu0 0.0
  %876 = vmatprep.subr.mxu0 0.0
  %877 = vmatpush1.msra.mxu0 %v32
  %878 = vmatprep.subr.mxu0 0.0
  %879 = vmatpush1.msra.mxu0 %v31
  %880 = vmatprep.subr.mxu0 0.0
  %881 = vmatpush1.msra.mxu0 %v30
  %882 = vmatprep.subr.mxu0 0.0
  %883 = vmatpush1.msra.mxu0 %v29
  %884 = vmatprep.subr.mxu0 0.0
  %885 = vmatpush2.msra.mxu0 0.0
  %886 = vmatprep.subr.mxu0 0.0
  %887 = vmatpush2.msra.mxu0 0.0
  %888 = vmatprep.subr.mxu0 0.0
  %889 = vmatpush2.msra.mxu0 0.0
  %890 = vmatprep.subr.mxu0 0.0
  %891 = vmatpush2.msra.mxu0 0.0
  %892 = vmatprep.subr.mxu0 0.0
  %893 = vmatpush2.msra.mxu0 0.0
  %894 = vmatprep.subr.mxu0 0.0
  %895 = vmatpush2.msra.mxu0 0.0
  %896 = vmatprep.subr.mxu0 0.0
  %897 = vmatpush2.msra.mxu0 0.0
  %898 = vmatprep.subr.mxu0 0.0
  %899 = vmatpush2.msra.mxu0 0.0
  %900 = vmatprep.subr.mxu0 0.0
  %901 = vmatpush2.msra.mxu0 0.0
  %902 = vmatprep.subr.mxu0 0.0
  %903 = vmatpush2.msra.mxu0 0.0
  %904 = vmatprep.subr.mxu0 0.0
  %905 = vmatpush2.msra.mxu0 0.0
  %906 = vmatprep.subr.mxu0 0.0
  %907 = vmatpush2.msra.mxu0 0.0
  %908 = vmatprep.subr.mxu0 0.0
  %909 = vmatpush2.msra.mxu0 0.0
  %910 = vmatprep.subr.mxu0 0.0
  %911 = vmatpush2.msra.mxu0 0.0
  %912 = vmatprep.subr.mxu0 0.0
  %913 = vmatpush2.msra.mxu0 0.0
  %914 = vmatprep.subr.mxu0 0.0
  %915 = vmatpush2.msra.mxu0 0.0
  %916 = vmatprep.mubr.f32.mxu0 0.0
  %917 = vmatmul.mubr.f32.gmra.mxu0 %v850
  %v918 = vpop.f32.mrf.mxu0
  %v919 = vadd.f32 0.0, %v918
  %v920 = vpop.f32.mrf.mxu0
  %921 = vdwg.mxu0
  %v922 = vadd.f32 %v252, %v919
  %v923 = vtanh.pop %v922
  %v924 = vmul.f32 %v923, 0.5
  %v925 = vadd.f32 %v924, 0.5
  %v926 = vmul.f32 %v925, %v759
  %928 = vrot.lane.b32.xlu0 %v923, 64
  %v929 = vpop.permute.xlu0 %928
  %v931 = vmul.f32 %v925, %v929
  %933 = vrot.lane.b32.xlu0 %v931, 32
  %v934 = vpop.permute.xlu0 %933
  %v936 = vadd.f32 %v926, %v934
  %v937 = vtanh.pop %v936
  %939 = vrot.lane.b32.xlu0 %v937, 64
  %v940 = vpop.permute.xlu0 %939
  %v942 = vmul.f32 %v925, %v940
  %v943 = vmax.f32 %v942, 0.0
  %v944 = vld [vmem:[%s4 + $0x60] sm:$0xff]
  %v945 = vld [vmem:[%s4 + $0x68] sm:$0xff]
  %v946 = vld [vmem:[%s4 + $0x70] sm:$0xff]
  %v947 = vld [vmem:[%s4 + $0x78] sm:$0xff]
  %949 = vrot.lane.b32.xlu0 %v943, 32
  %v950 = vpop.permute.xlu0 %949
  %v951 = vsel %vm108, %v950, 0
  %953 = vmatprep.subr.mxu0 0.0
  %954 = vmatpush1.msra.mxu0 0.0
  %955 = vmatprep.subr.mxu0 0.0
  %956 = vmatpush1.msra.mxu0 0.0
  %957 = vmatprep.subr.mxu0 0.0
  %958 = vmatpush1.msra.mxu0 0.0
  %959 = vmatprep.subr.mxu0 0.0
  %960 = vmatpush1.msra.mxu0 0.0
  %961 = vmatprep.subr.mxu0 0.0
  %962 = vmatpush1.msra.mxu0 0.0
  %963 = vmatprep.subr.mxu0 0.0
  %964 = vmatpush1.msra.mxu0 0.0
  %965 = vmatprep.subr.mxu0 0.0
  %966 = vmatpush1.msra.mxu0 0.0
  %967 = vmatprep.subr.mxu0 0.0
  %968 = vmatpush1.msra.mxu0 0.0
  %969 = vmatprep.subr.mxu0 0.0
  %970 = vmatpush1.msra.mxu0 0.0
  %971 = vmatprep.subr.mxu0 0.0
  %972 = vmatpush1.msra.mxu0 0.0
  %973 = vmatprep.subr.mxu0 0.0
  %974 = vmatpush1.msra.mxu0 0.0
  %975 = vmatprep.subr.mxu0 0.0
  %976 = vmatpush1.msra.mxu0 0.0
  %977 = vmatprep.subr.mxu0 0.0
  %978 = vmatpush1.msra.mxu0 %v947
  %979 = vmatprep.subr.mxu0 0.0
  %980 = vmatpush1.msra.mxu0 %v946
  %981 = vmatprep.subr.mxu0 0.0
  %982 = vmatpush1.msra.mxu0 %v945
  %983 = vmatprep.subr.mxu0 0.0
  %984 = vmatpush1.msra.mxu0 %v944
  %985 = vmatprep.subr.mxu0 0.0
  %986 = vmatpush2.msra.mxu0 0.0
  %987 = vmatprep.subr.mxu0 0.0
  %988 = vmatpush2.msra.mxu0 0.0
  %989 = vmatprep.subr.mxu0 0.0
  %990 = vmatpush2.msra.mxu0 0.0
  %991 = vmatprep.subr.mxu0 0.0
  %992 = vmatpush2.msra.mxu0 0.0
  %993 = vmatprep.subr.mxu0 0.0
  %994 = vmatpush2.msra.mxu0 0.0
  %995 = vmatprep.subr.mxu0 0.0
  %996 = vmatpush2.msra.mxu0 0.0
  %997 = vmatprep.subr.mxu0 0.0
  %998 = vmatpush2.msra.mxu0 0.0
  %999 = vmatprep.subr.mxu0 0.0
  %1000 = vmatpush2.msra.mxu0 0.0
  %1001 = vmatprep.subr.mxu0 0.0
  %1002 = vmatpush2.msra.mxu0 0.0
  %1003 = vmatprep.subr.mxu0 0.0
  %1004 = vmatpush2.msra.mxu0 0.0
  %1005 = vmatprep.subr.mxu0 0.0
  %1006 = vmatpush2.msra.mxu0 0.0
  %1007 = vmatprep.subr.mxu0 0.0
  %1008 = vmatpush2.msra.mxu0 0.0
  %1009 = vmatprep.subr.mxu0 0.0
  %1010 = vmatpush2.msra.mxu0 0.0
  %1011 = vmatprep.subr.mxu0 0.0
  %1012 = vmatpush2.msra.mxu0 0.0
  %1013 = vmatprep.subr.mxu0 0.0
  %1014 = vmatpush2.msra.mxu0 0.0
  %1015 = vmatprep.subr.mxu0 0.0
  %1016 = vmatpush2.msra.mxu0 0.0
  %1017 = vmatprep.mubr.f32.mxu0 0.0
  %1018 = vmatmul.mubr.f32.gmra.mxu0 %v951
  %v1019 = vpop.f32.mrf.mxu0
  %v1020 = vadd.f32 0.0, %v1019
  %v1021 = vpop.f32.mrf.mxu0
  %1022 = vdwg.mxu0
  %v1023 = vadd.f32 %v846, %v1020
  %1025 = vrot.lane.b32.xlu0 %v942, 32
  %v1026 = vpop.permute.xlu0 %1025
  %v1027 = vsel %vm108, %v1026, 0
  %1029 = vmatprep.subr.mxu0 0.0
  %1030 = vmatpush1.msra.mxu0 0.0
  %1031 = vmatprep.subr.mxu0 0.0
  %1032 = vmatpush1.msra.mxu0 0.0
  %1033 = vmatprep.subr.mxu0 0.0
  %1034 = vmatpush1.msra.mxu0 0.0
  %1035 = vmatprep.subr.mxu0 0.0
  %1036 = vmatpush1.msra.mxu0 0.0
  %1037 = vmatprep.subr.mxu0 0.0
  %1038 = vmatpush1.msra.mxu0 0.0
  %1039 = vmatprep.subr.mxu0 0.0
  %1040 = vmatpush1.msra.mxu0 0.0
  %1041 = vmatprep.subr.mxu0 0.0
  %1042 = vmatpush1.msra.mxu0 0.0
  %1043 = vmatprep.subr.mxu0 0.0
  %1044 = vmatpush1.msra.mxu0 0.0
  %1045 = vmatprep.subr.mxu0 0.0
  %1046 = vmatpush1.msra.mxu0 0.0
  %1047 = vmatprep.subr.mxu0 0.0
  %1048 = vmatpush1.msra.mxu0 0.0
  %1049 = vmatprep.subr.mxu0 0.0
  %1050 = vmatpush1.msra.mxu0 0.0
  %1051 = vmatprep.subr.mxu0 0.0
  %1052 = vmatpush1.msra.mxu0 0.0
  %1053 = vmatprep.subr.mxu0 0.0
  %1054 = vmatpush1.msra.mxu0 %v32
  %1055 = vmatprep.subr.mxu0 0.0
  %1056 = vmatpush1.msra.mxu0 %v31
  %1057 = vmatprep.subr.mxu0 0.0
  %1058 = vmatpush1.msra.mxu0 %v30
  %1059 = vmatprep.subr.mxu0 0.0
  %1060 = vmatpush1.msra.mxu0 %v29
  %1061 = vmatprep.subr.mxu0 0.0
  %1062 = vmatpush2.msra.mxu0 0.0
  %1063 = vmatprep.subr.mxu0 0.0
  %1064 = vmatpush2.msra.mxu0 0.0
  %1065 = vmatprep.subr.mxu0 0.0
  %1066 = vmatpush2.msra.mxu0 0.0
  %1067 = vmatprep.subr.mxu0 0.0
  %1068 = vmatpush2.msra.mxu0 0.0
  %1069 = vmatprep.subr.mxu0 0.0
  %1070 = vmatpush2.msra.mxu0 0.0
  %1071 = vmatprep.subr.mxu0 0.0
  %1072 = vmatpush2.msra.mxu0 0.0
  %1073 = vmatprep.subr.mxu0 0.0
  %1074 = vmatpush2.msra.mxu0 0.0
  %1075 = vmatprep.subr.mxu0 0.0
  %1076 = vmatpush2.msra.mxu0 0.0
  %1077 = vmatprep.subr.mxu0 0.0
  %1078 = vmatpush2.msra.mxu0 0.0
  %1079 = vmatprep.subr.mxu0 0.0
  %1080 = vmatpush2.msra.mxu0 0.0
  %1081 = vmatprep.subr.mxu0 0.0
  %1082 = vmatpush2.msra.mxu0 0.0
  %1083 = vmatprep.subr.mxu0 0.0
  %1084 = vmatpush2.msra.mxu0 0.0
  %1085 = vmatprep.subr.mxu0 0.0
  %1086 = vmatpush2.msra.mxu0 0.0
  %1087 = vmatprep.subr.mxu0 0.0
  %1088 = vmatpush2.msra.mxu0 0.0
  %1089 = vmatprep.subr.mxu0 0.0
  %1090 = vmatpush2.msra.mxu0 0.0
  %1091 = vmatprep.subr.mxu0 0.0
  %1092 = vmatpush2.msra.mxu0 0.0
  %1093 = vmatprep.mubr.f32.mxu0 0.0
  %1094 = vmatmul.mubr.f32.gmra.mxu0 %v1027
  %v1095 = vpop.f32.mrf.mxu0
  %v1096 = vadd.f32 0.0, %v1095
  %v1097 = vpop.f32.mrf.mxu0
  %1098 = vdwg.mxu0
  %v1099 = vadd.f32 %v321, %v1096
  %v1100 = vtanh.pop %v1099
  %v1101 = vmul.f32 %v1100, 0.5
  %v1102 = vadd.f32 %v1101, 0.5
  %v1103 = vmul.f32 %v1102, %v936
  %1105 = vrot.lane.b32.xlu0 %v1100, 64
  %v1106 = vpop.permute.xlu0 %1105
  %v1108 = vmul.f32 %v1102, %v1106
  %1110 = vrot.lane.b32.xlu0 %v1108, 32
  %v1111 = vpop.permute.xlu0 %1110
  %v1113 = vadd.f32 %v1103, %v1111
  %v1114 = vtanh.pop %v1113
  %1116 = vrot.lane.b32.xlu0 %v1114, 64
  %v1117 = vpop.permute.xlu0 %1116
  %v1119 = vmul.f32 %v1102, %v1117
  %v1120 = vmax.f32 %v1119, 0.0
  %v1121 = vld [vmem:[%s4 + $0x80] sm:$0xff]
  %v1122 = vld [vmem:[%s4 + $0x88] sm:$0xff]
  %v1123 = vld [vmem:[%s4 + $0x90] sm:$0xff]
  %v1124 = vld [vmem:[%s4 + $0x98] sm:$0xff]
  %1126 = vrot.lane.b32.xlu0 %v1120, 32
  %v1127 = vpop.permute.xlu0 %1126
  %v1128 = vsel %vm108, %v1127, 0
  %1130 = vmatprep.subr.mxu0 0.0
  %1131 = vmatpush1.msra.mxu0 0.0
  %1132 = vmatprep.subr.mxu0 0.0
  %1133 = vmatpush1.msra.mxu0 0.0
  %1134 = vmatprep.subr.mxu0 0.0
  %1135 = vmatpush1.msra.mxu0 0.0
  %1136 = vmatprep.subr.mxu0 0.0
  %1137 = vmatpush1.msra.mxu0 0.0
  %1138 = vmatprep.subr.mxu0 0.0
  %1139 = vmatpush1.msra.mxu0 0.0
  %1140 = vmatprep.subr.mxu0 0.0
  %1141 = vmatpush1.msra.mxu0 0.0
  %1142 = vmatprep.subr.mxu0 0.0
  %1143 = vmatpush1.msra.mxu0 0.0
  %1144 = vmatprep.subr.mxu0 0.0
  %1145 = vmatpush1.msra.mxu0 0.0
  %1146 = vmatprep.subr.mxu0 0.0
  %1147 = vmatpush1.msra.mxu0 0.0
  %1148 = vmatprep.subr.mxu0 0.0
  %1149 = vmatpush1.msra.mxu0 0.0
  %1150 = vmatprep.subr.mxu0 0.0
  %1151 = vmatpush1.msra.mxu0 0.0
  %1152 = vmatprep.subr.mxu0 0.0
  %1153 = vmatpush1.msra.mxu0 0.0
  %1154 = vmatprep.subr.mxu0 0.0
  %1155 = vmatpush1.msra.mxu0 %v1124
  %1156 = vmatprep.subr.mxu0 0.0
  %1157 = vmatpush1.msra.mxu0 %v1123
  %1158 = vmatprep.subr.mxu0 0.0
  %1159 = vmatpush1.msra.mxu0 %v1122
  %1160 = vmatprep.subr.mxu0 0.0
  %1161 = vmatpush1.msra.mxu0 %v1121
  %1162 = vmatprep.subr.mxu0 0.0
  %1163 = vmatpush2.msra.mxu0 0.0
  %1164 = vmatprep.subr.mxu0 0.0
  %1165 = vmatpush2.msra.mxu0 0.0
  %1166 = vmatprep.subr.mxu0 0.0
  %1167 = vmatpush2.msra.mxu0 0.0
  %1168 = vmatprep.subr.mxu0 0.0
  %1169 = vmatpush2.msra.mxu0 0.0
  %1170 = vmatprep.subr.mxu0 0.0
  %1171 = vmatpush2.msra.mxu0 0.0
  %1172 = vmatprep.subr.mxu0 0.0
  %1173 = vmatpush2.msra.mxu0 0.0
  %1174 = vmatprep.subr.mxu0 0.0
  %1175 = vmatpush2.msra.mxu0 0.0
  %1176 = vmatprep.subr.mxu0 0.0
  %1177 = vmatpush2.msra.mxu0 0.0
  %1178 = vmatprep.subr.mxu0 0.0
  %1179 = vmatpush2.msra.mxu0 0.0
  %1180 = vmatprep.subr.mxu0 0.0
  %1181 = vmatpush2.msra.mxu0 0.0
  %1182 = vmatprep.subr.mxu0 0.0
  %1183 = vmatpush2.msra.mxu0 0.0
  %1184 = vmatprep.subr.mxu0 0.0
  %1185 = vmatpush2.msra.mxu0 0.0
  %1186 = vmatprep.subr.mxu0 0.0
  %1187 = vmatpush2.msra.mxu0 0.0
  %1188 = vmatprep.subr.mxu0 0.0
  %1189 = vmatpush2.msra.mxu0 0.0
  %1190 = vmatprep.subr.mxu0 0.0
  %1191 = vmatpush2.msra.mxu0 0.0
  %1192 = vmatprep.subr.mxu0 0.0
  %1193 = vmatpush2.msra.mxu0 0.0
  %1194 = vmatprep.mubr.f32.mxu0 0.0
  %1195 = vmatmul.mubr.f32.gmra.mxu0 %v1128
  %v1196 = vpop.f32.mrf.mxu0
  %v1197 = vadd.f32 0.0, %v1196
  %v1198 = vpop.f32.mrf.mxu0
  %1199 = vdwg.mxu0
  %v1200 = vadd.f32 %v1023, %v1197
  %1202 = vrot.lane.b32.xlu0 %v1119, 32
  %v1203 = vpop.permute.xlu0 %1202
  %v1204 = vsel %vm108, %v1203, 0
  %1206 = vmatprep.subr.mxu0 0.0
  %1207 = vmatpush1.msra.mxu0 0.0
  %1208 = vmatprep.subr.mxu0 0.0
  %1209 = vmatpush1.msra.mxu0 0.0
  %1210 = vmatprep.subr.mxu0 0.0
  %1211 = vmatpush1.msra.mxu0 0.0
  %1212 = vmatprep.subr.mxu0 0.0
  %1213 = vmatpush1.msra.mxu0 0.0
  %1214 = vmatprep.subr.mxu0 0.0
  %1215 = vmatpush1.msra.mxu0 0.0
  %1216 = vmatprep.subr.mxu0 0.0
  %1217 = vmatpush1.msra.mxu0 0.0
  %1218 = vmatprep.subr.mxu0 0.0
  %1219 = vmatpush1.msra.mxu0 0.0
  %1220 = vmatprep.subr.mxu0 0.0
  %1221 = vmatpush1.msra.mxu0 0.0
  %1222 = vmatprep.subr.mxu0 0.0
  %1223 = vmatpush1.msra.mxu0 0.0
  %1224 = vmatprep.subr.mxu0 0.0
  %1225 = vmatpush1.msra.mxu0 0.0
  %1226 = vmatprep.subr.mxu0 0.0
  %1227 = vmatpush1.msra.mxu0 0.0
  %1228 = vmatprep.subr.mxu0 0.0
  %1229 = vmatpush1.msra.mxu0 0.0
  %1230 = vmatprep.subr.mxu0 0.0
  %1231 = vmatpush1.msra.mxu0 %v32
  %1232 = vmatprep.subr.mxu0 0.0
  %1233 = vmatpush1.msra.mxu0 %v31
  %1234 = vmatprep.subr.mxu0 0.0
  %1235 = vmatpush1.msra.mxu0 %v30
  %1236 = vmatprep.subr.mxu0 0.0
  %1237 = vmatpush1.msra.mxu0 %v29
  %1238 = vmatprep.subr.mxu0 0.0
  %1239 = vmatpush2.msra.mxu0 0.0
  %1240 = vmatprep.subr.mxu0 0.0
  %1241 = vmatpush2.msra.mxu0 0.0
  %1242 = vmatprep.subr.mxu0 0.0
  %1243 = vmatpush2.msra.mxu0 0.0
  %1244 = vmatprep.subr.mxu0 0.0
  %1245 = vmatpush2.msra.mxu0 0.0
  %1246 = vmatprep.subr.mxu0 0.0
  %1247 = vmatpush2.msra.mxu0 0.0
  %1248 = vmatprep.subr.mxu0 0.0
  %1249 = vmatpush2.msra.mxu0 0.0
  %1250 = vmatprep.subr.mxu0 0.0
  %1251 = vmatpush2.msra.mxu0 0.0
  %1252 = vmatprep.subr.mxu0 0.0
  %1253 = vmatpush2.msra.mxu0 0.0
  %1254 = vmatprep.subr.mxu0 0.0
  %1255 = vmatpush2.msra.mxu0 0.0
  %1256 = vmatprep.subr.mxu0 0.0
  %1257 = vmatpush2.msra.mxu0 0.0
  %1258 = vmatprep.subr.mxu0 0.0
  %1259 = vmatpush2.msra.mxu0 0.0
  %1260 = vmatprep.subr.mxu0 0.0
  %1261 = vmatpush2.msra.mxu0 0.0
  %1262 = vmatprep.subr.mxu0 0.0
  %1263 = vmatpush2.msra.mxu0 0.0
  %1264 = vmatprep.subr.mxu0 0.0
  %1265 = vmatpush2.msra.mxu0 0.0
  %1266 = vmatprep.subr.mxu0 0.0
  %1267 = vmatpush2.msra.mxu0 0.0
  %1268 = vmatprep.subr.mxu0 0.0
  %1269 = vmatpush2.msra.mxu0 0.0
  %1270 = vmatprep.mubr.f32.mxu0 0.0
  %1271 = vmatmul.mubr.f32.gmra.mxu0 %v1204
  %v1272 = vpop.f32.mrf.mxu0
  %v1273 = vadd.f32 0.0, %v1272
  %v1274 = vpop.f32.mrf.mxu0
  %1275 = vdwg.mxu0
  %v1276 = vadd.f32 %v323, %v1273
  %v1277 = vtanh.pop %v1276
  %v1278 = vmul.f32 %v1277, 0.5
  %v1279 = vadd.f32 %v1278, 0.5
  %v1280 = vmul.f32 %v1279, %v1113
  %1282 = vrot.lane.b32.xlu0 %v1277, 64
  %v1283 = vpop.permute.xlu0 %1282
  %v1285 = vmul.f32 %v1279, %v1283
  %1287 = vrot.lane.b32.xlu0 %v1285, 32
  %v1288 = vpop.permute.xlu0 %1287
  %v1290 = vadd.f32 %v1280, %v1288
  %v1291 = vtanh.pop %v1290
  %1293 = vrot.lane.b32.xlu0 %v1291, 64
  %v1294 = vpop.permute.xlu0 %1293
  %v1296 = vmul.f32 %v1279, %v1294
  %v1297 = vmax.f32 %v1296, 0.0
  %v1298 = vld [vmem:[%s4 + $0xa0] sm:$0xff]
  %v1299 = vld [vmem:[%s4 + $0xa8] sm:$0xff]
  %v1300 = vld [vmem:[%s4 + $0xb0] sm:$0xff]
  %v1301 = vld [vmem:[%s4 + $0xb8] sm:$0xff]
  %1303 = vrot.lane.b32.xlu0 %v1297, 32
  %v1304 = vpop.permute.xlu0 %1303
  %v1305 = vsel %vm108, %v1304, 0
  %1307 = vmatprep.subr.mxu0 0.0
  %1308 = vmatpush1.msra.mxu0 0.0
  %1309 = vmatprep.subr.mxu0 0.0
  %1310 = vmatpush1.msra.mxu0 0.0
  %1311 = vmatprep.subr.mxu0 0.0
  %1312 = vmatpush1.msra.mxu0 0.0
  %1313 = vmatprep.subr.mxu0 0.0
  %1314 = vmatpush1.msra.mxu0 0.0
  %1315 = vmatprep.subr.mxu0 0.0
  %1316 = vmatpush1.msra.mxu0 0.0
  %1317 = vmatprep.subr.mxu0 0.0
  %1318 = vmatpush1.msra.mxu0 0.0
  %1319 = vmatprep.subr.mxu0 0.0
  %1320 = vmatpush1.msra.mxu0 0.0
  %1321 = vmatprep.subr.mxu0 0.0
  %1322 = vmatpush1.msra.mxu0 0.0
  %1323 = vmatprep.subr.mxu0 0.0
  %1324 = vmatpush1.msra.mxu0 0.0
  %1325 = vmatprep.subr.mxu0 0.0
  %1326 = vmatpush1.msra.mxu0 0.0
  %1327 = vmatprep.subr.mxu0 0.0
  %1328 = vmatpush1.msra.mxu0 0.0
  %1329 = vmatprep.subr.mxu0 0.0
  %1330 = vmatpush1.msra.mxu0 0.0
  %1331 = vmatprep.subr.mxu0 0.0
  %1332 = vmatpush1.msra.mxu0 %v1301
  %1333 = vmatprep.subr.mxu0 0.0
  %1334 = vmatpush1.msra.mxu0 %v1300
  %1335 = vmatprep.subr.mxu0 0.0
  %1336 = vmatpush1.msra.mxu0 %v1299
  %1337 = vmatprep.subr.mxu0 0.0
  %1338 = vmatpush1.msra.mxu0 %v1298
  %1339 = vmatprep.subr.mxu0 0.0
  %1340 = vmatpush2.msra.mxu0 0.0
  %1341 = vmatprep.subr.mxu0 0.0
  %1342 = vmatpush2.msra.mxu0 0.0
  %1343 = vmatprep.subr.mxu0 0.0
  %1344 = vmatpush2.msra.mxu0 0.0
  %1345 = vmatprep.subr.mxu0 0.0
  %1346 = vmatpush2.msra.mxu0 0.0
  %1347 = vmatprep.subr.mxu0 0.0
  %1348 = vmatpush2.msra.mxu0 0.0
  %1349 = vmatprep.subr.mxu0 0.0
  %1350 = vmatpush2.msra.mxu0 0.0
  %1351 = vmatprep.subr.mxu0 0.0
  %1352 = vmatpush2.msra.mxu0 0.0
  %1353 = vmatprep.subr.mxu0 0.0
  %1354 = vmatpush2.msra.mxu0 0.0
  %1355 = vmatprep.subr.mxu0 0.0
  %1356 = vmatpush2.msra.mxu0 0.0
  %1357 = vmatprep.subr.mxu0 0.0
  %1358 = vmatpush2.msra.mxu0 0.0
  %1359 = vmatprep.subr.mxu0 0.0
  %1360 = vmatpush2.msra.mxu0 0.0
  %1361 = vmatprep.subr.mxu0 0.0
  %1362 = vmatpush2.msra.mxu0 0.0
  %1363 = vmatprep.subr.mxu0 0.0
  %1364 = vmatpush2.msra.mxu0 0.0
  %1365 = vmatprep.subr.mxu0 0.0
  %1366 = vmatpush2.msra.mxu0 0.0
  %1367 = vmatprep.subr.mxu0 0.0
  %1368 = vmatpush2.msra.mxu0 0.0
  %1369 = vmatprep.subr.mxu0 0.0
  %1370 = vmatpush2.msra.mxu0 0.0
  %1371 = vmatprep.mubr.f32.mxu0 0.0
  %1372 = vmatmul.mubr.f32.gmra.mxu0 %v1305
  %v1373 = vpop.f32.mrf.mxu0
  %v1374 = vadd.f32 0.0, %v1373
  %v1375 = vpop.f32.mrf.mxu0
  %1376 = vdwg.mxu0
  %v1377 = vadd.f32 %v1200, %v1374
  %1379 = vrot.lane.b32.xlu0 %v1296, 32
  %v1380 = vpop.permute.xlu0 %1379
  %v1381 = vsel %vm108, %v1380, 0
  %1383 = vmatprep.subr.mxu0 0.0
  %1384 = vmatpush1.msra.mxu0 0.0
  %1385 = vmatprep.subr.mxu0 0.0
  %1386 = vmatpush1.msra.mxu0 0.0
  %1387 = vmatprep.subr.mxu0 0.0
  %1388 = vmatpush1.msra.mxu0 0.0
  %1389 = vmatprep.subr.mxu0 0.0
  %1390 = vmatpush1.msra.mxu0 0.0
  %1391 = vmatprep.subr.mxu0 0.0
  %1392 = vmatpush1.msra.mxu0 0.0
  %1393 = vmatprep.subr.mxu0 0.0
  %1394 = vmatpush1.msra.mxu0 0.0
  %1395 = vmatprep.subr.mxu0 0.0
  %1396 = vmatpush1.msra.mxu0 0.0
  %1397 = vmatprep.subr.mxu0 0.0
  %1398 = vmatpush1.msra.mxu0 0.0
  %1399 = vmatprep.subr.mxu0 0.0
  %1400 = vmatpush1.msra.mxu0 0.0
  %1401 = vmatprep.subr.mxu0 0.0
  %1402 = vmatpush1.msra.mxu0 0.0
  %1403 = vmatprep.subr.mxu0 0.0
  %1404 = vmatpush1.msra.mxu0 0.0
  %1405 = vmatprep.subr.mxu0 0.0
  %1406 = vmatpush1.msra.mxu0 0.0
  %1407 = vmatprep.subr.mxu0 0.0
  %1408 = vmatpush1.msra.mxu0 %v32
  %1409 = vmatprep.subr.mxu0 0.0
  %1410 = vmatpush1.msra.mxu0 %v31
  %1411 = vmatprep.subr.mxu0 0.0
  %1412 = vmatpush1.msra.mxu0 %v30
  %1413 = vmatprep.subr.mxu0 0.0
  %1414 = vmatpush1.msra.mxu0 %v29
  %1415 = vmatprep.subr.mxu0 0.0
  %1416 = vmatpush2.msra.mxu0 0.0
  %1417 = vmatprep.subr.mxu0 0.0
  %1418 = vmatpush2.msra.mxu0 0.0
  %1419 = vmatprep.subr.mxu0 0.0
  %1420 = vmatpush2.msra.mxu0 0.0
  %1421 = vmatprep.subr.mxu0 0.0
  %1422 = vmatpush2.msra.mxu0 0.0
  %1423 = vmatprep.subr.mxu0 0.0
  %1424 = vmatpush2.msra.mxu0 0.0
  %1425 = vmatprep.subr.mxu0 0.0
  %1426 = vmatpush2.msra.mxu0 0.0
  %1427 = vmatprep.subr.mxu0 0.0
  %1428 = vmatpush2.msra.mxu0 0.0
  %1429 = vmatprep.subr.mxu0 0.0
  %1430 = vmatpush2.msra.mxu0 0.0
  %1431 = vmatprep.subr.mxu0 0.0
  %1432 = vmatpush2.msra.mxu0 0.0
  %1433 = vmatprep.subr.mxu0 0.0
  %1434 = vmatpush2.msra.mxu0 0.0
  %1435 = vmatprep.subr.mxu0 0.0
  %1436 = vmatpush2.msra.mxu0 0.0
  %1437 = vmatprep.subr.mxu0 0.0
  %1438 = vmatpush2.msra.mxu0 0.0
  %1439 = vmatprep.subr.mxu0 0.0
  %1440 = vmatpush2.msra.mxu0 0.0
  %1441 = vmatprep.subr.mxu0 0.0
  %1442 = vmatpush2.msra.mxu0 0.0
  %1443 = vmatprep.subr.mxu0 0.0
  %1444 = vmatpush2.msra.mxu0 0.0
  %1445 = vmatprep.subr.mxu0 0.0
  %1446 = vmatpush2.msra.mxu0 0.0
  %1447 = vmatprep.mubr.f32.mxu0 0.0
  %1448 = vmatmul.mubr.f32.gmra.mxu0 %v1381
  %v1449 = vpop.f32.mrf.mxu0
  %v1450 = vadd.f32 0.0, %v1449
  %v1451 = vpop.f32.mrf.mxu0
  %1452 = vdwg.mxu0
  %v1453 = vadd.f32 %v392, %v1450
  %v1454 = vtanh.pop %v1453
  %v1455 = vmul.f32 %v1454, 0.5
  %v1456 = vadd.f32 %v1455, 0.5
  %v1457 = vmul.f32 %v1456, %v1290
  %1459 = vrot.lane.b32.xlu0 %v1454, 64
  %v1460 = vpop.permute.xlu0 %1459
  %v1462 = vmul.f32 %v1456, %v1460
  %1464 = vrot.lane.b32.xlu0 %v1462, 32
  %v1465 = vpop.permute.xlu0 %1464
  %v1467 = vadd.f32 %v1457, %v1465
  %v1468 = vtanh.pop %v1467
  %1470 = vrot.lane.b32.xlu0 %v1468, 64
  %v1471 = vpop.permute.xlu0 %1470
  %v1473 = vmul.f32 %v1456, %v1471
  %v1474 = vmax.f32 %v1473, 0.0
  %v1475 = vld [vmem:[%s4 + $0xc0] sm:$0xff]
  %v1476 = vld [vmem:[%s4 + $0xc8] sm:$0xff]
  %v1477 = vld [vmem:[%s4 + $0xd0] sm:$0xff]
  %v1478 = vld [vmem:[%s4 + $0xd8] sm:$0xff]
  %1480 = vrot.lane.b32.xlu0 %v1474, 32
  %v1481 = vpop.permute.xlu0 %1480
  %v1482 = vsel %vm108, %v1481, 0
  %1484 = vmatprep.subr.mxu0 0.0
  %1485 = vmatpush1.msra.mxu0 0.0
  %1486 = vmatprep.subr.mxu0 0.0
  %1487 = vmatpush1.msra.mxu0 0.0
  %1488 = vmatprep.subr.mxu0 0.0
  %1489 = vmatpush1.msra.mxu0 0.0
  %1490 = vmatprep.subr.mxu0 0.0
  %1491 = vmatpush1.msra.mxu0 0.0
  %1492 = vmatprep.subr.mxu0 0.0
  %1493 = vmatpush1.msra.mxu0 0.0
  %1494 = vmatprep.subr.mxu0 0.0
  %1495 = vmatpush1.msra.mxu0 0.0
  %1496 = vmatprep.subr.mxu0 0.0
  %1497 = vmatpush1.msra.mxu0 0.0
  %1498 = vmatprep.subr.mxu0 0.0
  %1499 = vmatpush1.msra.mxu0 0.0
  %1500 = vmatprep.subr.mxu0 0.0
  %1501 = vmatpush1.msra.mxu0 0.0
  %1502 = vmatprep.subr.mxu0 0.0
  %1503 = vmatpush1.msra.mxu0 0.0
  %1504 = vmatprep.subr.mxu0 0.0
  %1505 = vmatpush1.msra.mxu0 0.0
  %1506 = vmatprep.subr.mxu0 0.0
  %1507 = vmatpush1.msra.mxu0 0.0
  %1508 = vmatprep.subr.mxu0 0.0
  %1509 = vmatpush1.msra.mxu0 %v1478
  %1510 = vmatprep.subr.mxu0 0.0
  %1511 = vmatpush1.msra.mxu0 %v1477
  %1512 = vmatprep.subr.mxu0 0.0
  %1513 = vmatpush1.msra.mxu0 %v1476
  %1514 = vmatprep.subr.mxu0 0.0
  %1515 = vmatpush1.msra.mxu0 %v1475
  %1516 = vmatprep.subr.mxu0 0.0
  %1517 = vmatpush2.msra.mxu0 0.0
  %1518 = vmatprep.subr.mxu0 0.0
  %1519 = vmatpush2.msra.mxu0 0.0
  %1520 = vmatprep.subr.mxu0 0.0
  %1521 = vmatpush2.msra.mxu0 0.0
  %1522 = vmatprep.subr.mxu0 0.0
  %1523 = vmatpush2.msra.mxu0 0.0
  %1524 = vmatprep.subr.mxu0 0.0
  %1525 = vmatpush2.msra.mxu0 0.0
  %1526 = vmatprep.subr.mxu0 0.0
  %1527 = vmatpush2.msra.mxu0 0.0
  %1528 = vmatprep.subr.mxu0 0.0
  %1529 = vmatpush2.msra.mxu0 0.0
  %1530 = vmatprep.subr.mxu0 0.0
  %1531 = vmatpush2.msra.mxu0 0.0
  %1532 = vmatprep.subr.mxu0 0.0
  %1533 = vmatpush2.msra.mxu0 0.0
  %1534 = vmatprep.subr.mxu0 0.0
  %1535 = vmatpush2.msra.mxu0 0.0
  %1536 = vmatprep.subr.mxu0 0.0
  %1537 = vmatpush2.msra.mxu0 0.0
  %1538 = vmatprep.subr.mxu0 0.0
  %1539 = vmatpush2.msra.mxu0 0.0
  %1540 = vmatprep.subr.mxu0 0.0
  %1541 = vmatpush2.msra.mxu0 0.0
  %1542 = vmatprep.subr.mxu0 0.0
  %1543 = vmatpush2.msra.mxu0 0.0
  %1544 = vmatprep.subr.mxu0 0.0
  %1545 = vmatpush2.msra.mxu0 0.0
  %1546 = vmatprep.subr.mxu0 0.0
  %1547 = vmatpush2.msra.mxu0 0.0
  %1548 = vmatprep.mubr.f32.mxu0 0.0
  %1549 = vmatmul.mubr.f32.gmra.mxu0 %v1482
  %v1550 = vpop.f32.mrf.mxu0
  %v1551 = vadd.f32 0.0, %v1550
  %v1552 = vpop.f32.mrf.mxu0
  %1553 = vdwg.mxu0
  %v1554 = vadd.f32 %v1377, %v1551
  %1556 = vrot.lane.b32.xlu0 %v1473, 32
  %v1557 = vpop.permute.xlu0 %1556
  %v1558 = vsel %vm108, %v1557, 0
  %1560 = vmatprep.subr.mxu0 0.0
  %1561 = vmatpush1.msra.mxu0 0.0
  %1562 = vmatprep.subr.mxu0 0.0
  %1563 = vmatpush1.msra.mxu0 0.0
  %1564 = vmatprep.subr.mxu0 0.0
  %1565 = vmatpush1.msra.mxu0 0.0
  %1566 = vmatprep.subr.mxu0 0.0
  %1567 = vmatpush1.msra.mxu0 0.0
  %1568 = vmatprep.subr.mxu0 0.0
  %1569 = vmatpush1.msra.mxu0 0.0
  %1570 = vmatprep.subr.mxu0 0.0
  %1571 = vmatpush1.msra.mxu0 0.0
  %1572 = vmatprep.subr.mxu0 0.0
  %1573 = vmatpush1.msra.mxu0 0.0
  %1574 = vmatprep.subr.mxu0 0.0
  %1575 = vmatpush1.msra.mxu0 0.0
  %1576 = vmatprep.subr.mxu0 0.0
  %1577 = vmatpush1.msra.mxu0 0.0
  %1578 = vmatprep.subr.mxu0 0.0
  %1579 = vmatpush1.msra.mxu0 0.0
  %1580 = vmatprep.subr.mxu0 0.0
  %1581 = vmatpush1.msra.mxu0 0.0
  %1582 = vmatprep.subr.mxu0 0.0
  %1583 = vmatpush1.msra.mxu0 0.0
  %1584 = vmatprep.subr.mxu0 0.0
  %1585 = vmatpush1.msra.mxu0 %v32
  %1586 = vmatprep.subr.mxu0 0.0
  %1587 = vmatpush1.msra.mxu0 %v31
  %1588 = vmatprep.subr.mxu0 0.0
  %1589 = vmatpush1.msra.mxu0 %v30
  %1590 = vmatprep.subr.mxu0 0.0
  %1591 = vmatpush1.msra.mxu0 %v29
  %1592 = vmatprep.subr.mxu0 0.0
  %1593 = vmatpush2.msra.mxu0 0.0
  %1594 = vmatprep.subr.mxu0 0.0
  %1595 = vmatpush2.msra.mxu0 0.0
  %1596 = vmatprep.subr.mxu0 0.0
  %1597 = vmatpush2.msra.mxu0 0.0
  %1598 = vmatprep.subr.mxu0 0.0
  %1599 = vmatpush2.msra.mxu0 0.0
  %1600 = vmatprep.subr.mxu0 0.0
  %1601 = vmatpush2.msra.mxu0 0.0
  %1602 = vmatprep.subr.mxu0 0.0
  %1603 = vmatpush2.msra.mxu0 0.0
  %1604 = vmatprep.subr.mxu0 0.0
  %1605 = vmatpush2.msra.mxu0 0.0
  %1606 = vmatprep.subr.mxu0 0.0
  %1607 = vmatpush2.msra.mxu0 0.0
  %1608 = vmatprep.subr.mxu0 0.0
  %1609 = vmatpush2.msra.mxu0 0.0
  %1610 = vmatprep.subr.mxu0 0.0
  %1611 = vmatpush2.msra.mxu0 0.0
  %1612 = vmatprep.subr.mxu0 0.0
  %1613 = vmatpush2.msra.mxu0 0.0
  %1614 = vmatprep.subr.mxu0 0.0
  %1615 = vmatpush2.msra.mxu0 0.0
  %1616 = vmatprep.subr.mxu0 0.0
  %1617 = vmatpush2.msra.mxu0 0.0
  %1618 = vmatprep.subr.mxu0 0.0
  %1619 = vmatpush2.msra.mxu0 0.0
  %1620 = vmatprep.subr.mxu0 0.0
  %1621 = vmatpush2.msra.mxu0 0.0
  %1622 = vmatprep.subr.mxu0 0.0
  %1623 = vmatpush2.msra.mxu0 0.0
  %1624 = vmatprep.mubr.f32.mxu0 0.0
  %1625 = vmatmul.mubr.f32.gmra.mxu0 %v1558
  %v1626 = vpop.f32.mrf.mxu0
  %v1627 = vadd.f32 0.0, %v1626
  %v1628 = vpop.f32.mrf.mxu0
  %1629 = vdwg.mxu0
  %v1630 = vadd.f32 %v394, %v1627
  %v1631 = vtanh.pop %v1630
  %v1632 = vmul.f32 %v1631, 0.5
  %v1633 = vadd.f32 %v1632, 0.5
  %v1634 = vmul.f32 %v1633, %v1467
  %1636 = vrot.lane.b32.xlu0 %v1631, 64
  %v1637 = vpop.permute.xlu0 %1636
  %v1639 = vmul.f32 %v1633, %v1637
  %1641 = vrot.lane.b32.xlu0 %v1639, 32
  %v1642 = vpop.permute.xlu0 %1641
  %v1644 = vadd.f32 %v1634, %v1642
  %v1645 = vtanh.pop %v1644
  %1647 = vrot.lane.b32.xlu0 %v1645, 64
  %v1648 = vpop.permute.xlu0 %1647
  %v1650 = vmul.f32 %v1633, %v1648
  %v1651 = vmax.f32 %v1650, 0.0
  %v1652 = vld [vmem:[%s4 + $0xe0] sm:$0xff]
  %v1653 = vld [vmem:[%s4 + $0xe8] sm:$0xff]
  %v1654 = vld [vmem:[%s4 + $0xf0] sm:$0xff]
  %v1655 = vld [vmem:[%s4 + $0xf8] sm:$0xff]
  %1657 = vrot.lane.b32.xlu0 %v1651, 32
  %v1658 = vpop.permute.xlu0 %1657
  %v1659 = vsel %vm108, %v1658, 0
  %1661 = vmatprep.subr.mxu0 0.0
  %1662 = vmatpush1.msra.mxu0 0.0
  %1663 = vmatprep.subr.mxu0 0.0
  %1664 = vmatpush1.msra.mxu0 0.0
  %1665 = vmatprep.subr.mxu0 0.0
  %1666 = vmatpush1.msra.mxu0 0.0
  %1667 = vmatprep.subr.mxu0 0.0
  %1668 = vmatpush1.msra.mxu0 0.0
  %1669 = vmatprep.subr.mxu0 0.0
  %1670 = vmatpush1.msra.mxu0 0.0
  %1671 = vmatprep.subr.mxu0 0.0
  %1672 = vmatpush1.msra.mxu0 0.0
  %1673 = vmatprep.subr.mxu0 0.0
  %1674 = vmatpush1.msra.mxu0 0.0
  %1675 = vmatprep.subr.mxu0 0.0
  %1676 = vmatpush1.msra.mxu0 0.0
  %1677 = vmatprep.subr.mxu0 0.0
  %1678 = vmatpush1.msra.mxu0 0.0
  %1679 = vmatprep.subr.mxu0 0.0
  %1680 = vmatpush1.msra.mxu0 0.0
  %1681 = vmatprep.subr.mxu0 0.0
  %1682 = vmatpush1.msra.mxu0 0.0
  %1683 = vmatprep.subr.mxu0 0.0
  %1684 = vmatpush1.msra.mxu0 0.0
  %1685 = vmatprep.subr.mxu0 0.0
  %1686 = vmatpush1.msra.mxu0 %v1655
  %1687 = vmatprep.subr.mxu0 0.0
  %1688 = vmatpush1.msra.mxu0 %v1654
  %1689 = vmatprep.subr.mxu0 0.0
  %1690 = vmatpush1.msra.mxu0 %v1653
  %1691 = vmatprep.subr.mxu0 0.0
  %1692 = vmatpush1.msra.mxu0 %v1652
  %1693 = vmatprep.subr.mxu0 0.0
  %1694 = vmatpush2.msra.mxu0 0.0
  %1695 = vmatprep.subr.mxu0 0.0
  %1696 = vmatpush2.msra.mxu0 0.0
  %1697 = vmatprep.subr.mxu0 0.0
  %1698 = vmatpush2.msra.mxu0 0.0
  %1699 = vmatprep.subr.mxu0 0.0
  %1700 = vmatpush2.msra.mxu0 0.0
  %1701 = vmatprep.subr.mxu0 0.0
  %1702 = vmatpush2.msra.mxu0 0.0
  %1703 = vmatprep.subr.mxu0 0.0
  %1704 = vmatpush2.msra.mxu0 0.0
  %1705 = vmatprep.subr.mxu0 0.0
  %1706 = vmatpush2.msra.mxu0 0.0
  %1707 = vmatprep.subr.mxu0 0.0
  %1708 = vmatpush2.msra.mxu0 0.0
  %1709 = vmatprep.subr.mxu0 0.0
  %1710 = vmatpush2.msra.mxu0 0.0
  %1711 = vmatprep.subr.mxu0 0.0
  %1712 = vmatpush2.msra.mxu0 0.0
  %1713 = vmatprep.subr.mxu0 0.0
  %1714 = vmatpush2.msra.mxu0 0.0
  %1715 = vmatprep.subr.mxu0 0.0
  %1716 = vmatpush2.msra.mxu0 0.0
  %1717 = vmatprep.subr.mxu0 0.0
  %1718 = vmatpush2.msra.mxu0 0.0
  %1719 = vmatprep.subr.mxu0 0.0
  %1720 = vmatpush2.msra.mxu0 0.0
  %1721 = vmatprep.subr.mxu0 0.0
  %1722 = vmatpush2.msra.mxu0 0.0
  %1723 = vmatprep.subr.mxu0 0.0
  %1724 = vmatpush2.msra.mxu0 0.0
  %1725 = vmatprep.mubr.f32.mxu0 0.0
  %1726 = vmatmul.mubr.f32.gmra.mxu0 %v1659
  %v1727 = vpop.f32.mrf.mxu0
  %v1728 = vadd.f32 0.0, %v1727
  %v1729 = vpop.f32.mrf.mxu0
  %1730 = vdwg.mxu0
  %v1731 = vadd.f32 %v1554, %v1728
  %v1732 = vld [vmem:[%s5] sm:$0x1]
  %v1734 = vlaneseq
  %v1735 = vshrl.u32 %v1734, 7
  %v1736 = vsub.s32 0, %v1735
  %v1737 = vrot.slane %v1732, %v1736
  %v1739 = vadd.f32 %v1731, %v1737
  %v1740 = vmax.f32 %v1739, 0.0
  %v1741 = vld [vmem:[%s6] sm:$0xff]
  %v1742 = vld [vmem:[%s6 + $0x8] sm:$0xff]
  %v1743 = vld [vmem:[%s6 + $0x10] sm:$0xff]
  %v1744 = vld [vmem:[%s6 + $0x18] sm:$0xff]
  %v1745 = vld [vmem:[%s7] sm:$0x1]
  %v1747 = vlaneseq
  %v1748 = vshrl.u32 %v1747, 7
  %v1749 = vsub.s32 0, %v1748
  %v1750 = vrot.slane %v1745, %v1749
  %v1753 = vsel %vm108, %v1740, 0
  %1755 = vmatprep.subr.mxu0 0.0
  %1756 = vmatpush1.msra.mxu0 0.0
  %1757 = vmatprep.subr.mxu0 0.0
  %1758 = vmatpush1.msra.mxu0 0.0
  %1759 = vmatprep.subr.mxu0 0.0
  %1760 = vmatpush1.msra.mxu0 0.0
  %1761 = vmatprep.subr.mxu0 0.0
  %1762 = vmatpush1.msra.mxu0 0.0
  %1763 = vmatprep.subr.mxu0 0.0
  %1764 = vmatpush1.msra.mxu0 0.0
  %1765 = vmatprep.subr.mxu0 0.0
  %1766 = vmatpush1.msra.mxu0 0.0
  %1767 = vmatprep.subr.mxu0 0.0
  %1768 = vmatpush1.msra.mxu0 0.0
  %1769 = vmatprep.subr.mxu0 0.0
  %1770 = vmatpush1.msra.mxu0 0.0
  %1771 = vmatprep.subr.mxu0 0.0
  %1772 = vmatpush1.msra.mxu0 0.0
  %1773 = vmatprep.subr.mxu0 0.0
  %1774 = vmatpush1.msra.mxu0 0.0
  %1775 = vmatprep.subr.mxu0 0.0
  %1776 = vmatpush1.msra.mxu0 0.0
  %1777 = vmatprep.subr.mxu0 0.0
  %1778 = vmatpush1.msra.mxu0 0.0
  %1779 = vmatprep.subr.mxu0 0.0
  %1780 = vmatpush1.msra.mxu0 %v1744
  %1781 = vmatprep.subr.mxu0 0.0
  %1782 = vmatpush1.msra.mxu0 %v1743
  %1783 = vmatprep.subr.mxu0 0.0
  %1784 = vmatpush1.msra.mxu0 %v1742
  %1785 = vmatprep.subr.mxu0 0.0
  %1786 = vmatpush1.msra.mxu0 %v1741
  %1787 = vmatprep.subr.mxu0 0.0
  %1788 = vmatpush2.msra.mxu0 0.0
  %1789 = vmatprep.subr.mxu0 0.0
  %1790 = vmatpush2.msra.mxu0 0.0
  %1791 = vmatprep.subr.mxu0 0.0
  %1792 = vmatpush2.msra.mxu0 0.0
  %1793 = vmatprep.subr.mxu0 0.0
  %1794 = vmatpush2.msra.mxu0 0.0
  %1795 = vmatprep.subr.mxu0 0.0
  %1796 = vmatpush2.msra.mxu0 0.0
  %1797 = vmatprep.subr.mxu0 0.0
  %1798 = vmatpush2.msra.mxu0 0.0
  %1799 = vmatprep.subr.mxu0 0.0
  %1800 = vmatpush2.msra.mxu0 0.0
  %1801 = vmatprep.subr.mxu0 0.0
  %1802 = vmatpush2.msra.mxu0 0.0
  %1803 = vmatprep.subr.mxu0 0.0
  %1804 = vmatpush2.msra.mxu0 0.0
  %1805 = vmatprep.subr.mxu0 0.0
  %1806 = vmatpush2.msra.mxu0 0.0
  %1807 = vmatprep.subr.mxu0 0.0
  %1808 = vmatpush2.msra.mxu0 0.0
  %1809 = vmatprep.subr.mxu0 0.0
  %1810 = vmatpush2.msra.mxu0 0.0
  %1811 = vmatprep.subr.mxu0 0.0
  %1812 = vmatpush2.msra.mxu0 0.0
  %1813 = vmatprep.subr.mxu0 0.0
  %1814 = vmatpush2.msra.mxu0 0.0
  %1815 = vmatprep.subr.mxu0 0.0
  %1816 = vmatpush2.msra.mxu0 0.0
  %1817 = vmatprep.subr.mxu0 0.0
  %1818 = vmatpush2.msra.mxu0 0.0
  %1819 = vmatprep.mubr.f32.mxu0 0.0
  %1820 = vmatmul.mubr.f32.gmra.mxu0 %v1753
  %v1821 = vpop.f32.mrf.mxu0
  %v1822 = vadd.f32 %v1750, %v1821
  %v1823 = vpop.f32.mrf.mxu0
  %1824 = vdwg.mxu0
  %vm1825 = vcmask 31744
  %1826 = vst.msk [vmem:[%s8] sm:$0xff] %vm1825, %v1822
  // Predicated region
  $region34: #{dqn_forward.1} parent=0 // pred_check
    _
  $region35: #{dqn_forward.1} parent=0 // pred_check_branch
    %1828 = sbr.rel (0) target = $region37
  $region36: #{dqn_forward.1} parent=0 // pred_region
    _
  $region37: #{dqn_forward.1} parent=0 // pred_fallthru
    _
  // Predicated region
  $region38: #{dqn_forward.1} parent=0 // pred_check
    _
  $region39: #{dqn_forward.1} parent=0 // pred_check_branch
    %1830 = sbr.rel (0) target = $region41
  $region40: #{dqn_forward.1} parent=0 // pred_region
    _
  $region41: #{dqn_forward.1} parent=0 // pred_fallthru
    _

</llo_original>
